<compile_context>
chip_gen: v7x
topology: tpu7x:2x2x1
jax: 0.10.0
libtpu: 0.0.40
codegen_flags: <defaults>
</compile_context>

<pallas_src>
import numpy as np
import jax
import jax.numpy as jnp
from jax import lax
from jax.experimental import pallas as pl
from jax.experimental.pallas import tpu as pltpu


_VMEM = pl.BlockSpec(memory_space=pltpu.MemorySpace.VMEM)


# ---------------------------------------------------------------------------
# Fused kernel: conv1+pool -> conv2+pool -> fc1 -> fc2 -> log_softmax
# ---------------------------------------------------------------------------
def fused_convnet_kernel(p1_ref, w1m_ref, b1_ref, w2m_ref, b2_ref,
                         wf1_ref, bf1_ref, wf2_ref, bf2_ref, out_ref):
    N = out_ref.shape[1]                 # batch
    CH = p1_ref.shape[1] // 16           # lane width of one (component, phase) chunk
    L2 = 33 * N                          # lanes covering all valid 5x5 conv2 outputs

    # --- conv1 (1->8, 3x3) + bias + ReLU + 2x2 max-pool -------------------------
    # One MXU matmul over the pre-built im2col matrix:
    #   rows   = 9 taps (dy*3+dx)
    #   lanes  = 16 chunks of CH: (polyphase comp c = ry*2+rx) x (pool phase p = a*2+b)
    pre1 = jnp.dot(w1m_ref[...], p1_ref[...], preferred_element_type=jnp.float32)
    pre1 = jnp.maximum(pre1 + b1_ref[...], 0.0)            # bias added once (hoisted)

    comps = []                                             # pooled h1, polyphase layout (VMEM-resident)
    for c in range(4):                                     # c = ry*2 + rx
        m = pre1[:, (4 * c) * CH:(4 * c + 1) * CH]
        for p in range(1, 4):                              # max over the 4 pool phases
            m = jnp.maximum(m, pre1[:, (4 * c + p) * CH:(4 * c + p + 1) * CH])
        comps.append(m)                                    # (8, CH), lane = (u*7+v)*N + n

    # --- conv2 (8->8, 3x3) + bias + ReLU + 2x2 max-pool -------------------------
    # Per pool phase: build a (72, L2) patch matrix by sublane-stacking lane-shifted
    # slices of the polyphase components, then one MXU matmul against (8, 72).
    pooled = None
    for a in range(2):
        for b in range(2):
            blocks = []
            for dy in range(3):
                for dx in range(3):
                    ky, kx = a + dy, b + dx
                    ry, qy = ky % 2, ky // 2
                    rx, qx = kx % 2, kx // 2
                    shift = (qy * 7 + qx) * N
                    blocks.append(comps[ry * 2 + rx][:, shift:shift + L2])
            patch = jnp.concatenate(blocks, axis=0)        # (72, L2), row = (dy*3+dx)*8 + ic
            acc = jnp.dot(w2m_ref[...], patch, preferred_element_type=jnp.float32)
            acc = jnp.maximum(acc + b2_ref[...], 0.0)      # (8, L2)
            pooled = acc if pooled is None else jnp.maximum(pooled, acc)

    # --- flatten + fc1 + ReLU + fc2 + log_softmax (MXU, (features, N) layout) ----
    zb = [pooled[:, (i * 7 + j) * N:(i * 7 + j) * N + N]
          for i in range(5) for j in range(5)]
    z = jnp.concatenate(zb, axis=0)                        # (200, N), row = (i*5+j)*8 + oc

    h = jnp.dot(wf1_ref[...], z, preferred_element_type=jnp.float32) + bf1_ref[...]
    h = jnp.maximum(h, 0.0)                                # (64, N)
    logits = jnp.dot(wf2_ref[...], h, preferred_element_type=jnp.float32) + bf2_ref[...]

    m = jnp.max(logits, axis=0, keepdims=True)             # log_softmax over the class dim
    s = logits - m
    lse = jnp.log(jnp.sum(jnp.exp(s), axis=0, keepdims=True))
    out_ref[...] = s - lse                                 # (10, N)


# ---------------------------------------------------------------------------
# Forward pass: XLA glue builds the conv1 im2col/polyphase patches and reorders
# the weights; all compute happens in the single fused Pallas kernel.
# ---------------------------------------------------------------------------
@jax.jit
def convnet_forward(x, params):
    w1, b1, w2, b2, wf1, bf1, wf2, bf2 = params
    N = x.shape[0]
    M1 = 49 * N
    CH = ((M1 + 127) // 128) * 128                         # lane-align each chunk

    x0 = x[:, 0]                                           # (N, 28, 28)
    x_pad = jnp.pad(x0, ((0, 0), (0, 4), (0, 4)))          # (N, 32, 32) zero pad for edge phases

    # conv1 im2col, directly in "polyphase component x pool phase" output layout.
    chunks = []
    for ry in (0, 1):
        for rx in (0, 1):
            for a in (0, 1):
                for b in (0, 1):
                    rows = []
                    for dy in range(3):
                        for dx in range(3):
                            oy = 2 * ry + a + dy
                            ox = 2 * rx + b + dx
                            patch = x_pad[:, oy:oy + 28:4, ox:ox + 28:4]   # (N, 7, 7)
                            rows.append(patch.transpose(1, 2, 0).reshape(1, M1))
                    chunk = jnp.concatenate(rows, axis=0)                  # (9, M1)
                    chunks.append(jnp.pad(chunk, ((0, 0), (0, CH - M1))))
    p1 = jnp.concatenate(chunks, axis=1)                   # (9, 16*CH)

    # weight / bias reordering to match in-kernel row orders
    w1m = w1.reshape(8, 9)                                          # (oc, dy*3+dx)
    w2m = w2.transpose(0, 2, 3, 1).reshape(8, 72)                   # (oc, (dy*3+dx)*8+ic)
    wf1p = wf1.reshape(64, 8, 5, 5).transpose(0, 2, 3, 1).reshape(64, 200)  # col=(i*5+j)*8+oc

    out_t = pl.pallas_call(
        fused_convnet_kernel,
        out_shape=jax.ShapeDtypeStruct((10, N), jnp.float32),
        in_specs=[_VMEM] * 9,
        out_specs=_VMEM,
    )(p1, w1m, b1.reshape(8, 1), w2m, b2.reshape(8, 1),
      wf1p, bf1.reshape(64, 1), wf2, bf2.reshape(10, 1))

    return out_t.T                                         # (N, 10)


# ---------------------------------------------------------------------------
# Pure-JAX reference (for correctness check)
# ---------------------------------------------------------------------------
def reference_forward(x, params):
    w1, b1, w2, b2, wf1, bf1, wf2, bf2 = params
    dn = ('NCHW', 'OIHW', 'NCHW')
    y = lax.conv_general_dilated(x, w1, (1, 1), 'VALID', dimension_numbers=dn)
    y = jnp.maximum(y + b1[None, :, None, None], 0.0)
    y = lax.reduce_window(y, -jnp.inf, lax.max, (1, 1, 2, 2), (1, 1, 2, 2), 'VALID')
    y = lax.conv_general_dilated(y, w2, (1, 1), 'VALID', dimension_numbers=dn)
    y = jnp.maximum(y + b2[None, :, None, None], 0.0)
    y = lax.reduce_window(y, -jnp.inf, lax.max, (1, 1, 2, 2), (1, 1, 2, 2), 'VALID')
    y = y.reshape(y.shape[0], -1)
    y = jnp.maximum(y @ wf1.T + bf1, 0.0)
    y = y @ wf2.T + bf2
    return jax.nn.log_softmax(y, axis=1)


def init_params(key):
    def uinit(k, shape, fan_in):
        bound = 1.0 / np.sqrt(fan_in)
        return jax.random.uniform(k, shape, jnp.float32, -bound, bound)

    ks = jax.random.split(key, 8)
    w1 = uinit(ks[0], (8, 1, 3, 3), 9)
    b1 = uinit(ks[1], (8,), 9)
    w2 = uinit(ks[2], (8, 8, 3, 3), 72)
    b2 = uinit(ks[3], (8,), 72)
    wf1 = uinit(ks[4], (64, 200), 200)
    bf1 = uinit(ks[5], (64,), 200)
    wf2 = uinit(ks[6], (10, 64), 64)
    bf2 = uinit(ks[7], (10,), 64)
    return (w1, b1, w2, b2, wf1, bf1, wf2, bf2)


if __name__ == "__main__":
    key = jax.random.PRNGKey(0)
    kx, kp = jax.random.split(key)
    params = init_params(kp)
    # ConvNetV0's fc1(200, ...) implies a 28x28 single-channel input (MNIST-like).
    x = jax.random.normal(kx, (2, 1, 28, 28), jnp.float32)

    out = jax.block_until_ready(convnet_forward(x, params))
    assert out.shape == (2, 10)

    ref = reference_forward(x, params)
    np.testing.assert_allclose(np.asarray(out), np.asarray(ref), rtol=2e-4, atol=2e-4)
    print("KERNEL_OK")
</pallas_src>

<mosaic_0001>
module attributes {stable_mosaic.version = 11 : i64} {
  func.func @fused_convnet_kernel(%arg0: memref<9x2048xf32, #tpu.memory_space<vmem>>, %arg1: memref<8x9xf32, #tpu.memory_space<vmem>>, %arg2: memref<8x1xf32, #tpu.memory_space<vmem>>, %arg3: memref<8x72xf32, #tpu.memory_space<vmem>>, %arg4: memref<8x1xf32, #tpu.memory_space<vmem>>, %arg5: memref<64x200xf32, #tpu.memory_space<vmem>>, %arg6: memref<64x1xf32, #tpu.memory_space<vmem>>, %arg7: memref<10x64xf32, #tpu.memory_space<vmem>>, %arg8: memref<10x1xf32, #tpu.memory_space<vmem>>, %arg9: memref<10x2xf32, #tpu.memory_space<vmem>>) attributes {dimension_semantics = [], scalar_prefetch = 0 : i64, scratch_operands = 0 : i64, tpu.core_type = #tpu.core_type<tc>} {
    %c0 = arith.constant 0 : index
    %c0_0 = arith.constant 0 : index
    %0 = vector.load %arg1[%c0, %c0_0] : memref<8x9xf32, #tpu.memory_space<vmem>>, vector<8x9xf32>
    %c0_1 = arith.constant 0 : index
    %c0_2 = arith.constant 0 : index
    %1 = vector.load %arg0[%c0_1, %c0_2] : memref<9x2048xf32, #tpu.memory_space<vmem>>, vector<9x2048xf32>
    %cst = arith.constant dense<0.000000e+00> : vector<8x2048xf32>
    %2 = tpu.matmul %0, %1, %cst {dimension_numbers = #tpu.dot_dimension_numbers<[1], [0], [0], [1], [0, 0, 1, 1], [], []>} : vector<8x9xf32>, vector<9x2048xf32>, vector<8x2048xf32> -> vector<8x2048xf32>
    %c0_3 = arith.constant 0 : index
    %c0_4 = arith.constant 0 : index
    %3 = vector.load %arg2[%c0_3, %c0_4] : memref<8x1xf32, #tpu.memory_space<vmem>>, vector<8x1xf32>
    %4 = vector.broadcast %3 : vector<8x1xf32> to vector<8x2048xf32>
    %5 = arith.addf %2, %4 : vector<8x2048xf32>
    %cst_5 = arith.constant 0.000000e+00 : f32
    %6 = vector.broadcast %cst_5 : f32 to vector<8x2048xf32>
    %7 = arith.maximumf %5, %6 : vector<8x2048xf32>
    %8 = vector.extract_strided_slice %7 {offsets = [0, 0], sizes = [8, 128], strides = [1, 1]} : vector<8x2048xf32> to vector<8x128xf32>
    %9 = vector.extract_strided_slice %7 {offsets = [0, 128], sizes = [8, 128], strides = [1, 1]} : vector<8x2048xf32> to vector<8x128xf32>
    %10 = arith.maximumf %8, %9 : vector<8x128xf32>
    %11 = vector.extract_strided_slice %7 {offsets = [0, 256], sizes = [8, 128], strides = [1, 1]} : vector<8x2048xf32> to vector<8x128xf32>
    %12 = arith.maximumf %10, %11 : vector<8x128xf32>
    %13 = vector.extract_strided_slice %7 {offsets = [0, 384], sizes = [8, 128], strides = [1, 1]} : vector<8x2048xf32> to vector<8x128xf32>
    %14 = arith.maximumf %12, %13 : vector<8x128xf32>
    %15 = vector.extract_strided_slice %7 {offsets = [0, 512], sizes = [8, 128], strides = [1, 1]} : vector<8x2048xf32> to vector<8x128xf32>
    %16 = vector.extract_strided_slice %7 {offsets = [0, 640], sizes = [8, 128], strides = [1, 1]} : vector<8x2048xf32> to vector<8x128xf32>
    %17 = arith.maximumf %15, %16 : vector<8x128xf32>
    %18 = vector.extract_strided_slice %7 {offsets = [0, 768], sizes = [8, 128], strides = [1, 1]} : vector<8x2048xf32> to vector<8x128xf32>
    %19 = arith.maximumf %17, %18 : vector<8x128xf32>
    %20 = vector.extract_strided_slice %7 {offsets = [0, 896], sizes = [8, 128], strides = [1, 1]} : vector<8x2048xf32> to vector<8x128xf32>
    %21 = arith.maximumf %19, %20 : vector<8x128xf32>
    %22 = vector.extract_strided_slice %7 {offsets = [0, 1024], sizes = [8, 128], strides = [1, 1]} : vector<8x2048xf32> to vector<8x128xf32>
    %23 = vector.extract_strided_slice %7 {offsets = [0, 1152], sizes = [8, 128], strides = [1, 1]} : vector<8x2048xf32> to vector<8x128xf32>
    %24 = arith.maximumf %22, %23 : vector<8x128xf32>
    %25 = vector.extract_strided_slice %7 {offsets = [0, 1280], sizes = [8, 128], strides = [1, 1]} : vector<8x2048xf32> to vector<8x128xf32>
    %26 = arith.maximumf %24, %25 : vector<8x128xf32>
    %27 = vector.extract_strided_slice %7 {offsets = [0, 1408], sizes = [8, 128], strides = [1, 1]} : vector<8x2048xf32> to vector<8x128xf32>
    %28 = arith.maximumf %26, %27 : vector<8x128xf32>
    %29 = vector.extract_strided_slice %7 {offsets = [0, 1536], sizes = [8, 128], strides = [1, 1]} : vector<8x2048xf32> to vector<8x128xf32>
    %30 = vector.extract_strided_slice %7 {offsets = [0, 1664], sizes = [8, 128], strides = [1, 1]} : vector<8x2048xf32> to vector<8x128xf32>
    %31 = arith.maximumf %29, %30 : vector<8x128xf32>
    %32 = vector.extract_strided_slice %7 {offsets = [0, 1792], sizes = [8, 128], strides = [1, 1]} : vector<8x2048xf32> to vector<8x128xf32>
    %33 = arith.maximumf %31, %32 : vector<8x128xf32>
    %34 = vector.extract_strided_slice %7 {offsets = [0, 1920], sizes = [8, 128], strides = [1, 1]} : vector<8x2048xf32> to vector<8x128xf32>
    %35 = arith.maximumf %33, %34 : vector<8x128xf32>
    %36 = vector.extract_strided_slice %14 {offsets = [0, 0], sizes = [8, 66], strides = [1, 1]} : vector<8x128xf32> to vector<8x66xf32>
    %37 = vector.extract_strided_slice %21 {offsets = [0, 0], sizes = [8, 66], strides = [1, 1]} : vector<8x128xf32> to vector<8x66xf32>
    %38 = vector.extract_strided_slice %14 {offsets = [0, 2], sizes = [8, 66], strides = [1, 1]} : vector<8x128xf32> to vector<8x66xf32>
    %39 = vector.extract_strided_slice %28 {offsets = [0, 0], sizes = [8, 66], strides = [1, 1]} : vector<8x128xf32> to vector<8x66xf32>
    %40 = vector.extract_strided_slice %35 {offsets = [0, 0], sizes = [8, 66], strides = [1, 1]} : vector<8x128xf32> to vector<8x66xf32>
    %41 = vector.extract_strided_slice %28 {offsets = [0, 2], sizes = [8, 66], strides = [1, 1]} : vector<8x128xf32> to vector<8x66xf32>
    %42 = vector.extract_strided_slice %14 {offsets = [0, 14], sizes = [8, 66], strides = [1, 1]} : vector<8x128xf32> to vector<8x66xf32>
    %43 = vector.extract_strided_slice %21 {offsets = [0, 14], sizes = [8, 66], strides = [1, 1]} : vector<8x128xf32> to vector<8x66xf32>
    %44 = vector.extract_strided_slice %14 {offsets = [0, 16], sizes = [8, 66], strides = [1, 1]} : vector<8x128xf32> to vector<8x66xf32>
    %45 = tpu.concatenate %36, %37, %38, %39, %40, %41, %42, %43, %44 in 0 : vector<8x66xf32>, vector<8x66xf32>, vector<8x66xf32>, vector<8x66xf32>, vector<8x66xf32>, vector<8x66xf32>, vector<8x66xf32>, vector<8x66xf32>, vector<8x66xf32> -> vector<72x66xf32>
    %c0_6 = arith.constant 0 : index
    %c0_7 = arith.constant 0 : index
    %46 = vector.load %arg3[%c0_6, %c0_7] : memref<8x72xf32, #tpu.memory_space<vmem>>, vector<8x72xf32>
    %cst_8 = arith.constant dense<0.000000e+00> : vector<8x66xf32>
    %47 = tpu.matmul %46, %45, %cst_8 {dimension_numbers = #tpu.dot_dimension_numbers<[1], [0], [0], [1], [0, 0, 1, 1], [], []>} : vector<8x72xf32>, vector<72x66xf32>, vector<8x66xf32> -> vector<8x66xf32>
    %c0_9 = arith.constant 0 : index
    %c0_10 = arith.constant 0 : index
    %48 = vector.load %arg4[%c0_9, %c0_10] : memref<8x1xf32, #tpu.memory_space<vmem>>, vector<8x1xf32>
    %49 = vector.broadcast %48 : vector<8x1xf32> to vector<8x66xf32>
    %50 = arith.addf %47, %49 : vector<8x66xf32>
    %cst_11 = arith.constant 0.000000e+00 : f32
    %51 = vector.broadcast %cst_11 : f32 to vector<8x66xf32>
    %52 = arith.maximumf %50, %51 : vector<8x66xf32>
    %53 = vector.extract_strided_slice %21 {offsets = [0, 0], sizes = [8, 66], strides = [1, 1]} : vector<8x128xf32> to vector<8x66xf32>
    %54 = vector.extract_strided_slice %14 {offsets = [0, 2], sizes = [8, 66], strides = [1, 1]} : vector<8x128xf32> to vector<8x66xf32>
    %55 = vector.extract_strided_slice %21 {offsets = [0, 2], sizes = [8, 66], strides = [1, 1]} : vector<8x128xf32> to vector<8x66xf32>
    %56 = vector.extract_strided_slice %35 {offsets = [0, 0], sizes = [8, 66], strides = [1, 1]} : vector<8x128xf32> to vector<8x66xf32>
    %57 = vector.extract_strided_slice %28 {offsets = [0, 2], sizes = [8, 66], strides = [1, 1]} : vector<8x128xf32> to vector<8x66xf32>
    %58 = vector.extract_strided_slice %35 {offsets = [0, 2], sizes = [8, 66], strides = [1, 1]} : vector<8x128xf32> to vector<8x66xf32>
    %59 = vector.extract_strided_slice %21 {offsets = [0, 14], sizes = [8, 66], strides = [1, 1]} : vector<8x128xf32> to vector<8x66xf32>
    %60 = vector.extract_strided_slice %14 {offsets = [0, 16], sizes = [8, 66], strides = [1, 1]} : vector<8x128xf32> to vector<8x66xf32>
    %61 = vector.extract_strided_slice %21 {offsets = [0, 16], sizes = [8, 66], strides = [1, 1]} : vector<8x128xf32> to vector<8x66xf32>
    %62 = tpu.concatenate %53, %54, %55, %56, %57, %58, %59, %60, %61 in 0 : vector<8x66xf32>, vector<8x66xf32>, vector<8x66xf32>, vector<8x66xf32>, vector<8x66xf32>, vector<8x66xf32>, vector<8x66xf32>, vector<8x66xf32>, vector<8x66xf32> -> vector<72x66xf32>
    %c0_12 = arith.constant 0 : index
    %c0_13 = arith.constant 0 : index
    %63 = vector.load %arg3[%c0_12, %c0_13] : memref<8x72xf32, #tpu.memory_space<vmem>>, vector<8x72xf32>
    %cst_14 = arith.constant dense<0.000000e+00> : vector<8x66xf32>
    %64 = tpu.matmul %63, %62, %cst_14 {dimension_numbers = #tpu.dot_dimension_numbers<[1], [0], [0], [1], [0, 0, 1, 1], [], []>} : vector<8x72xf32>, vector<72x66xf32>, vector<8x66xf32> -> vector<8x66xf32>
    %c0_15 = arith.constant 0 : index
    %c0_16 = arith.constant 0 : index
    %65 = vector.load %arg4[%c0_15, %c0_16] : memref<8x1xf32, #tpu.memory_space<vmem>>, vector<8x1xf32>
    %66 = vector.broadcast %65 : vector<8x1xf32> to vector<8x66xf32>
    %67 = arith.addf %64, %66 : vector<8x66xf32>
    %cst_17 = arith.constant 0.000000e+00 : f32
    %68 = vector.broadcast %cst_17 : f32 to vector<8x66xf32>
    %69 = arith.maximumf %67, %68 : vector<8x66xf32>
    %70 = arith.maximumf %52, %69 : vector<8x66xf32>
    %71 = vector.extract_strided_slice %28 {offsets = [0, 0], sizes = [8, 66], strides = [1, 1]} : vector<8x128xf32> to vector<8x66xf32>
    %72 = vector.extract_strided_slice %35 {offsets = [0, 0], sizes = [8, 66], strides = [1, 1]} : vector<8x128xf32> to vector<8x66xf32>
    %73 = vector.extract_strided_slice %28 {offsets = [0, 2], sizes = [8, 66], strides = [1, 1]} : vector<8x128xf32> to vector<8x66xf32>
    %74 = vector.extract_strided_slice %14 {offsets = [0, 14], sizes = [8, 66], strides = [1, 1]} : vector<8x128xf32> to vector<8x66xf32>
    %75 = vector.extract_strided_slice %21 {offsets = [0, 14], sizes = [8, 66], strides = [1, 1]} : vector<8x128xf32> to vector<8x66xf32>
    %76 = vector.extract_strided_slice %14 {offsets = [0, 16], sizes = [8, 66], strides = [1, 1]} : vector<8x128xf32> to vector<8x66xf32>
    %77 = vector.extract_strided_slice %28 {offsets = [0, 14], sizes = [8, 66], strides = [1, 1]} : vector<8x128xf32> to vector<8x66xf32>
    %78 = vector.extract_strided_slice %35 {offsets = [0, 14], sizes = [8, 66], strides = [1, 1]} : vector<8x128xf32> to vector<8x66xf32>
    %79 = vector.extract_strided_slice %28 {offsets = [0, 16], sizes = [8, 66], strides = [1, 1]} : vector<8x128xf32> to vector<8x66xf32>
    %80 = tpu.concatenate %71, %72, %73, %74, %75, %76, %77, %78, %79 in 0 : vector<8x66xf32>, vector<8x66xf32>, vector<8x66xf32>, vector<8x66xf32>, vector<8x66xf32>, vector<8x66xf32>, vector<8x66xf32>, vector<8x66xf32>, vector<8x66xf32> -> vector<72x66xf32>
    %c0_18 = arith.constant 0 : index
    %c0_19 = arith.constant 0 : index
    %81 = vector.load %arg3[%c0_18, %c0_19] : memref<8x72xf32, #tpu.memory_space<vmem>>, vector<8x72xf32>
    %cst_20 = arith.constant dense<0.000000e+00> : vector<8x66xf32>
    %82 = tpu.matmul %81, %80, %cst_20 {dimension_numbers = #tpu.dot_dimension_numbers<[1], [0], [0], [1], [0, 0, 1, 1], [], []>} : vector<8x72xf32>, vector<72x66xf32>, vector<8x66xf32> -> vector<8x66xf32>
    %c0_21 = arith.constant 0 : index
    %c0_22 = arith.constant 0 : index
    %83 = vector.load %arg4[%c0_21, %c0_22] : memref<8x1xf32, #tpu.memory_space<vmem>>, vector<8x1xf32>
    %84 = vector.broadcast %83 : vector<8x1xf32> to vector<8x66xf32>
    %85 = arith.addf %82, %84 : vector<8x66xf32>
    %cst_23 = arith.constant 0.000000e+00 : f32
    %86 = vector.broadcast %cst_23 : f32 to vector<8x66xf32>
    %87 = arith.maximumf %85, %86 : vector<8x66xf32>
    %88 = arith.maximumf %70, %87 : vector<8x66xf32>
    %89 = vector.extract_strided_slice %35 {offsets = [0, 0], sizes = [8, 66], strides = [1, 1]} : vector<8x128xf32> to vector<8x66xf32>
    %90 = vector.extract_strided_slice %28 {offsets = [0, 2], sizes = [8, 66], strides = [1, 1]} : vector<8x128xf32> to vector<8x66xf32>
    %91 = vector.extract_strided_slice %35 {offsets = [0, 2], sizes = [8, 66], strides = [1, 1]} : vector<8x128xf32> to vector<8x66xf32>
    %92 = vector.extract_strided_slice %21 {offsets = [0, 14], sizes = [8, 66], strides = [1, 1]} : vector<8x128xf32> to vector<8x66xf32>
    %93 = vector.extract_strided_slice %14 {offsets = [0, 16], sizes = [8, 66], strides = [1, 1]} : vector<8x128xf32> to vector<8x66xf32>
    %94 = vector.extract_strided_slice %21 {offsets = [0, 16], sizes = [8, 66], strides = [1, 1]} : vector<8x128xf32> to vector<8x66xf32>
    %95 = vector.extract_strided_slice %35 {offsets = [0, 14], sizes = [8, 66], strides = [1, 1]} : vector<8x128xf32> to vector<8x66xf32>
    %96 = vector.extract_strided_slice %28 {offsets = [0, 16], sizes = [8, 66], strides = [1, 1]} : vector<8x128xf32> to vector<8x66xf32>
    %97 = vector.extract_strided_slice %35 {offsets = [0, 16], sizes = [8, 66], strides = [1, 1]} : vector<8x128xf32> to vector<8x66xf32>
    %98 = tpu.concatenate %89, %90, %91, %92, %93, %94, %95, %96, %97 in 0 : vector<8x66xf32>, vector<8x66xf32>, vector<8x66xf32>, vector<8x66xf32>, vector<8x66xf32>, vector<8x66xf32>, vector<8x66xf32>, vector<8x66xf32>, vector<8x66xf32> -> vector<72x66xf32>
    %c0_24 = arith.constant 0 : index
    %c0_25 = arith.constant 0 : index
    %99 = vector.load %arg3[%c0_24, %c0_25] : memref<8x72xf32, #tpu.memory_space<vmem>>, vector<8x72xf32>
    %cst_26 = arith.constant dense<0.000000e+00> : vector<8x66xf32>
    %100 = tpu.matmul %99, %98, %cst_26 {dimension_numbers = #tpu.dot_dimension_numbers<[1], [0], [0], [1], [0, 0, 1, 1], [], []>} : vector<8x72xf32>, vector<72x66xf32>, vector<8x66xf32> -> vector<8x66xf32>
    %c0_27 = arith.constant 0 : index
    %c0_28 = arith.constant 0 : index
    %101 = vector.load %arg4[%c0_27, %c0_28] : memref<8x1xf32, #tpu.memory_space<vmem>>, vector<8x1xf32>
    %102 = vector.broadcast %101 : vector<8x1xf32> to vector<8x66xf32>
    %103 = arith.addf %100, %102 : vector<8x66xf32>
    %cst_29 = arith.constant 0.000000e+00 : f32
    %104 = vector.broadcast %cst_29 : f32 to vector<8x66xf32>
    %105 = arith.maximumf %103, %104 : vector<8x66xf32>
    %106 = arith.maximumf %88, %105 : vector<8x66xf32>
    %107 = vector.extract_strided_slice %106 {offsets = [0, 0], sizes = [8, 2], strides = [1, 1]} : vector<8x66xf32> to vector<8x2xf32>
    %108 = vector.extract_strided_slice %106 {offsets = [0, 2], sizes = [8, 2], strides = [1, 1]} : vector<8x66xf32> to vector<8x2xf32>
    %109 = vector.extract_strided_slice %106 {offsets = [0, 4], sizes = [8, 2], strides = [1, 1]} : vector<8x66xf32> to vector<8x2xf32>
    %110 = vector.extract_strided_slice %106 {offsets = [0, 6], sizes = [8, 2], strides = [1, 1]} : vector<8x66xf32> to vector<8x2xf32>
    %111 = vector.extract_strided_slice %106 {offsets = [0, 8], sizes = [8, 2], strides = [1, 1]} : vector<8x66xf32> to vector<8x2xf32>
    %112 = vector.extract_strided_slice %106 {offsets = [0, 14], sizes = [8, 2], strides = [1, 1]} : vector<8x66xf32> to vector<8x2xf32>
    %113 = vector.extract_strided_slice %106 {offsets = [0, 16], sizes = [8, 2], strides = [1, 1]} : vector<8x66xf32> to vector<8x2xf32>
    %114 = vector.extract_strided_slice %106 {offsets = [0, 18], sizes = [8, 2], strides = [1, 1]} : vector<8x66xf32> to vector<8x2xf32>
    %115 = vector.extract_strided_slice %106 {offsets = [0, 20], sizes = [8, 2], strides = [1, 1]} : vector<8x66xf32> to vector<8x2xf32>
    %116 = vector.extract_strided_slice %106 {offsets = [0, 22], sizes = [8, 2], strides = [1, 1]} : vector<8x66xf32> to vector<8x2xf32>
    %117 = vector.extract_strided_slice %106 {offsets = [0, 28], sizes = [8, 2], strides = [1, 1]} : vector<8x66xf32> to vector<8x2xf32>
    %118 = vector.extract_strided_slice %106 {offsets = [0, 30], sizes = [8, 2], strides = [1, 1]} : vector<8x66xf32> to vector<8x2xf32>
    %119 = vector.extract_strided_slice %106 {offsets = [0, 32], sizes = [8, 2], strides = [1, 1]} : vector<8x66xf32> to vector<8x2xf32>
    %120 = vector.extract_strided_slice %106 {offsets = [0, 34], sizes = [8, 2], strides = [1, 1]} : vector<8x66xf32> to vector<8x2xf32>
    %121 = vector.extract_strided_slice %106 {offsets = [0, 36], sizes = [8, 2], strides = [1, 1]} : vector<8x66xf32> to vector<8x2xf32>
    %122 = vector.extract_strided_slice %106 {offsets = [0, 42], sizes = [8, 2], strides = [1, 1]} : vector<8x66xf32> to vector<8x2xf32>
    %123 = vector.extract_strided_slice %106 {offsets = [0, 44], sizes = [8, 2], strides = [1, 1]} : vector<8x66xf32> to vector<8x2xf32>
    %124 = vector.extract_strided_slice %106 {offsets = [0, 46], sizes = [8, 2], strides = [1, 1]} : vector<8x66xf32> to vector<8x2xf32>
    %125 = vector.extract_strided_slice %106 {offsets = [0, 48], sizes = [8, 2], strides = [1, 1]} : vector<8x66xf32> to vector<8x2xf32>
    %126 = vector.extract_strided_slice %106 {offsets = [0, 50], sizes = [8, 2], strides = [1, 1]} : vector<8x66xf32> to vector<8x2xf32>
    %127 = vector.extract_strided_slice %106 {offsets = [0, 56], sizes = [8, 2], strides = [1, 1]} : vector<8x66xf32> to vector<8x2xf32>
    %128 = vector.extract_strided_slice %106 {offsets = [0, 58], sizes = [8, 2], strides = [1, 1]} : vector<8x66xf32> to vector<8x2xf32>
    %129 = vector.extract_strided_slice %106 {offsets = [0, 60], sizes = [8, 2], strides = [1, 1]} : vector<8x66xf32> to vector<8x2xf32>
    %130 = vector.extract_strided_slice %106 {offsets = [0, 62], sizes = [8, 2], strides = [1, 1]} : vector<8x66xf32> to vector<8x2xf32>
    %131 = vector.extract_strided_slice %106 {offsets = [0, 64], sizes = [8, 2], strides = [1, 1]} : vector<8x66xf32> to vector<8x2xf32>
    %132 = tpu.concatenate %107, %108, %109, %110, %111, %112, %113, %114, %115, %116, %117, %118, %119, %120, %121, %122 in 0 : vector<8x2xf32>, vector<8x2xf32>, vector<8x2xf32>, vector<8x2xf32>, vector<8x2xf32>, vector<8x2xf32>, vector<8x2xf32>, vector<8x2xf32>, vector<8x2xf32>, vector<8x2xf32>, vector<8x2xf32>, vector<8x2xf32>, vector<8x2xf32>, vector<8x2xf32>, vector<8x2xf32>, vector<8x2xf32> -> vector<128x2xf32>
    %133 = tpu.concatenate %123, %124, %125, %126, %127, %128, %129, %130, %131 in 0 : vector<8x2xf32>, vector<8x2xf32>, vector<8x2xf32>, vector<8x2xf32>, vector<8x2xf32>, vector<8x2xf32>, vector<8x2xf32>, vector<8x2xf32>, vector<8x2xf32> -> vector<72x2xf32>
    %134 = tpu.concatenate %132, %133 in 0 : vector<128x2xf32>, vector<72x2xf32> -> vector<200x2xf32>
    %c0_30 = arith.constant 0 : index
    %c0_31 = arith.constant 0 : index
    %135 = vector.load %arg5[%c0_30, %c0_31] : memref<64x200xf32, #tpu.memory_space<vmem>>, vector<64x200xf32>
    %cst_32 = arith.constant dense<0.000000e+00> : vector<64x2xf32>
    %136 = tpu.matmul %135, %134, %cst_32 {dimension_numbers = #tpu.dot_dimension_numbers<[1], [0], [0], [1], [0, 0, 1, 1], [], []>} : vector<64x200xf32>, vector<200x2xf32>, vector<64x2xf32> -> vector<64x2xf32>
    %c0_33 = arith.constant 0 : index
    %c0_34 = arith.constant 0 : index
    %137 = vector.load %arg6[%c0_33, %c0_34] : memref<64x1xf32, #tpu.memory_space<vmem>>, vector<64x1xf32>
    %138 = vector.broadcast %137 : vector<64x1xf32> to vector<64x2xf32>
    %139 = arith.addf %136, %138 : vector<64x2xf32>
    %cst_35 = arith.constant 0.000000e+00 : f32
    %140 = vector.broadcast %cst_35 : f32 to vector<64x2xf32>
    %141 = arith.maximumf %139, %140 : vector<64x2xf32>
    %c0_36 = arith.constant 0 : index
    %c0_37 = arith.constant 0 : index
    %142 = vector.load %arg7[%c0_36, %c0_37] : memref<10x64xf32, #tpu.memory_space<vmem>>, vector<10x64xf32>
    %cst_38 = arith.constant dense<0.000000e+00> : vector<10x2xf32>
    %143 = tpu.matmul %142, %141, %cst_38 {dimension_numbers = #tpu.dot_dimension_numbers<[1], [0], [0], [1], [0, 0, 1, 1], [], []>} : vector<10x64xf32>, vector<64x2xf32>, vector<10x2xf32> -> vector<10x2xf32>
    %c0_39 = arith.constant 0 : index
    %c0_40 = arith.constant 0 : index
    %144 = vector.load %arg8[%c0_39, %c0_40] : memref<10x1xf32, #tpu.memory_space<vmem>>, vector<10x1xf32>
    %145 = vector.broadcast %144 : vector<10x1xf32> to vector<10x2xf32>
    %146 = arith.addf %143, %145 : vector<10x2xf32>
    %cst_41 = arith.constant dense<0xFF800000> : vector<2xf32>
    %147 = vector.multi_reduction <maximumf>, %146, %cst_41 [0] : vector<10x2xf32> to vector<2xf32>
    %148 = vector.shape_cast %147 : vector<2xf32> to vector<1x2xf32>
    %149 = vector.broadcast %148 : vector<1x2xf32> to vector<10x2xf32>
    %150 = arith.subf %146, %149 : vector<10x2xf32>
    %151 = math.exp %150 : vector<10x2xf32>
    %cst_42 = arith.constant dense<0.000000e+00> : vector<2xf32>
    %152 = vector.multi_reduction <add>, %151, %cst_42 [0] : vector<10x2xf32> to vector<2xf32>
    %153 = vector.shape_cast %152 : vector<2xf32> to vector<1x2xf32>
    %154 = math.log %153 : vector<1x2xf32>
    %155 = vector.broadcast %154 : vector<1x2xf32> to vector<10x2xf32>
    %156 = arith.subf %150, %155 : vector<10x2xf32>
    %c0_43 = arith.constant 0 : index
    %c0_44 = arith.constant 0 : index
    %157 = vector.load %arg9[%c0_43, %c0_44] : memref<10x2xf32, #tpu.memory_space<vmem>>, vector<10x2xf32>
    tpu.vector_store %arg9[%c0_43, %c0_44], %156 {strides = array<i32>} : memref<10x2xf32, #tpu.memory_space<vmem>>, vector<10x2xf32>,
    return
  }
}

</mosaic_0001>

<llo_original>
// kernel: convnet_forward.1
$region0: #{convnet_forward.1}
  #allocation0 [shape = 'u32[]', space=smem, size = 0x4, offset = 0x4, fixed_abs, tag = 'smem constant byte address 0x4 - core index']
  #allocation1 [shape = 'u32[144,128]{1,0:T(1,128)}', space=vmem, size = 0x12000, scoped, tag = 'internal scratch']
  %s0 = inlined_call_operand.vmem [shape: f32[9,2048], index: 0, kind: input, shape index: {}]
  %s1 = inlined_call_operand.vmem [shape: f32[8,9], index: 1, kind: input, shape index: {}]
  %s2 = inlined_call_operand.vmem [shape: f32[8,1], index: 2, kind: input, shape index: {}]
  %s3 = inlined_call_operand.vmem [shape: f32[8,72], index: 3, kind: input, shape index: {}]
  %s4 = inlined_call_operand.vmem [shape: f32[8,1], index: 4, kind: input, shape index: {}]
  %s5 = inlined_call_operand.vmem [shape: f32[64,200], index: 5, kind: input, shape index: {}]
  %s6 = inlined_call_operand.vmem [shape: f32[64,1], index: 6, kind: input, shape index: {}]
  %s7 = inlined_call_operand.vmem [shape: f32[10,64], index: 7, kind: input, shape index: {}]
  %s8 = inlined_call_operand.vmem [shape: f32[10,1], index: 8, kind: input, shape index: {}]
  %s9 = inlined_call_operand.vmem [shape: f32[10,2], index: 9, kind: output, shape index: {}]
  %s10 = sld [smem:[#allocation0]]
  $region46: #{convnet_forward.1} parent=0
    _
  %s12 = ssub.s32 1, %s10
  %s13 = scalar_select 0, %s12, %s10
  // Predicated region
  $region2: #{convnet_forward.1} parent=0 // pred_check
    _
  $region3: #{convnet_forward.1} parent=0 // pred_check_branch
    %15 = sbr.rel (0) target = $region5
  $region4: #{convnet_forward.1} parent=0 // pred_region
    _
  $region5: #{convnet_forward.1} parent=0 // pred_fallthru
    _
  // Predicated region
  $region6: #{convnet_forward.1} parent=0 // pred_check
    _
  $region7: #{convnet_forward.1} parent=0 // pred_check_branch
    %17 = sbr.rel (0) target = $region9
  $region8: #{convnet_forward.1} parent=0 // pred_region
    _
  $region9: #{convnet_forward.1} parent=0 // pred_fallthru
    _
  // Predicated region
  $region10: #{convnet_forward.1} parent=0 // pred_check
    _
  $region11: #{convnet_forward.1} parent=0 // pred_check_branch
    %19 = sbr.rel (0) target = $region13
  $region12: #{convnet_forward.1} parent=0 // pred_region
    _
  $region13: #{convnet_forward.1} parent=0 // pred_fallthru
    _
  // Predicated region
  $region14: #{convnet_forward.1} parent=0 // pred_check
    _
  $region15: #{convnet_forward.1} parent=0 // pred_check_branch
    %21 = sbr.rel (0) target = $region17
  $region16: #{convnet_forward.1} parent=0 // pred_region
    _
  $region17: #{convnet_forward.1} parent=0 // pred_fallthru
    _
  // Predicated region
  $region18: #{convnet_forward.1} parent=0 // pred_check
    _
  $region19: #{convnet_forward.1} parent=0 // pred_check_branch
    %23 = sbr.rel (0) target = $region21
  $region20: #{convnet_forward.1} parent=0 // pred_region
    _
  $region21: #{convnet_forward.1} parent=0 // pred_fallthru
    _
  // Predicated region
  $region22: #{convnet_forward.1} parent=0 // pred_check
    _
  $region23: #{convnet_forward.1} parent=0 // pred_check_branch
    %25 = sbr.rel (0) target = $region25
  $region24: #{convnet_forward.1} parent=0 // pred_region
    _
  $region25: #{convnet_forward.1} parent=0 // pred_fallthru
    _
  // Predicated region
  $region26: #{convnet_forward.1} parent=0 // pred_check
    _
  $region27: #{convnet_forward.1} parent=0 // pred_check_branch
    %27 = sbr.rel (0) target = $region29
  $region28: #{convnet_forward.1} parent=0 // pred_region
    _
  $region29: #{convnet_forward.1} parent=0 // pred_fallthru
    _
  // Predicated region
  $region30: #{convnet_forward.1} parent=0 // pred_check
    _
  $region31: #{convnet_forward.1} parent=0 // pred_check_branch
    %29 = sbr.rel (0) target = $region33
  $region32: #{convnet_forward.1} parent=0 // pred_region
    _
  $region33: #{convnet_forward.1} parent=0 // pred_fallthru
    _
  // Predicated region
  $region34: #{convnet_forward.1} parent=0 // pred_check
    _
  $region35: #{convnet_forward.1} parent=0 // pred_check_branch
    %31 = sbr.rel (0) target = $region37
  $region36: #{convnet_forward.1} parent=0 // pred_region
    _
  $region37: #{convnet_forward.1} parent=0 // pred_fallthru
    _
  %v32 = vld [vmem:[%s1] sm:$0xff]
  %v33 = vld [vmem:[%s0] sm:$0xff]
  %v34 = vld [vmem:[%s0 + $0x8] sm:$0xff]
  %v35 = vld [vmem:[%s0 + $0x10] sm:$0xff]
  %v36 = vld [vmem:[%s0 + $0x18] sm:$0xff]
  %v37 = vld [vmem:[%s0 + $0x20] sm:$0xff]
  %v38 = vld [vmem:[%s0 + $0x28] sm:$0xff]
  %v39 = vld [vmem:[%s0 + $0x30] sm:$0xff]
  %v40 = vld [vmem:[%s0 + $0x38] sm:$0xff]
  %v41 = vld [vmem:[%s0 + $0x40] sm:$0xff]
  %v42 = vld [vmem:[%s0 + $0x48] sm:$0xff]
  %v43 = vld [vmem:[%s0 + $0x50] sm:$0xff]
  %v44 = vld [vmem:[%s0 + $0x58] sm:$0xff]
  %v45 = vld [vmem:[%s0 + $0x60] sm:$0xff]
  %v46 = vld [vmem:[%s0 + $0x68] sm:$0xff]
  %v47 = vld [vmem:[%s0 + $0x70] sm:$0xff]
  %v48 = vld [vmem:[%s0 + $0x78] sm:$0xff]
  %v49 = vld [vmem:[%s0 + $0x80] sm:$0x1]
  %v50 = vld [vmem:[%s0 + $0x88] sm:$0x1]
  %v51 = vld [vmem:[%s0 + $0x90] sm:$0x1]
  %v52 = vld [vmem:[%s0 + $0x98] sm:$0x1]
  %v53 = vld [vmem:[%s0 + $0xa0] sm:$0x1]
  %v54 = vld [vmem:[%s0 + $0xa8] sm:$0x1]
  %v55 = vld [vmem:[%s0 + $0xb0] sm:$0x1]
  %v56 = vld [vmem:[%s0 + $0xb8] sm:$0x1]
  %v57 = vld [vmem:[%s0 + $0xc0] sm:$0x1]
  %v58 = vld [vmem:[%s0 + $0xc8] sm:$0x1]
  %v59 = vld [vmem:[%s0 + $0xd0] sm:$0x1]
  %v60 = vld [vmem:[%s0 + $0xd8] sm:$0x1]
  %v61 = vld [vmem:[%s0 + $0xe0] sm:$0x1]
  %v62 = vld [vmem:[%s0 + $0xe8] sm:$0x1]
  %v63 = vld [vmem:[%s0 + $0xf0] sm:$0x1]
  %v64 = vld [vmem:[%s0 + $0xf8] sm:$0x1]
  %v65 = vld [vmem:[%s2] sm:$0xff]
  %67 = vset.pattern.permute.xlu0 0
  %68 = vperm.xlu0 %67, %v65
  %v69 = vpop.permute.xlu0 %68
  %vm71 = vcmask 72704
  %v73 = vsel %vm71, %v32, 0
  %vm75 = vcmask 1040384
  %v77 = vsel %vm75, %v49, 0
  %v80 = vsel %vm75, %v50, 0
  %v83 = vsel %vm75, %v51, 0
  %v86 = vsel %vm75, %v52, 0
  %v89 = vsel %vm75, %v53, 0
  %v92 = vsel %vm75, %v54, 0
  %v95 = vsel %vm75, %v55, 0
  %v98 = vsel %vm75, %v56, 0
  %v101 = vsel %vm75, %v57, 0
  %v104 = vsel %vm75, %v58, 0
  %v107 = vsel %vm75, %v59, 0
  %v110 = vsel %vm75, %v60, 0
  %v113 = vsel %vm75, %v61, 0
  %v116 = vsel %vm75, %v62, 0
  %v119 = vsel %vm75, %v63, 0
  %v122 = vsel %vm75, %v64, 0
  %124 = vmatprep.subr.mxu0 %v34
  %125 = vmatpush1.msra.mxu0 %v33
  %126 = vmatprep.subr.mxu0 %v80
  %127 = vmatpush1.msra.mxu0 %v77
  %128 = vmatprep.subr.mxu0 0.0
  %129 = vmatpush1.msra.mxu0 0.0
  %130 = vmatprep.subr.mxu0 0.0
  %131 = vmatpush1.msra.mxu0 0.0
  %132 = vmatprep.subr.mxu0 0.0
  %133 = vmatpush1.msra.mxu0 0.0
  %134 = vmatprep.subr.mxu0 0.0
  %135 = vmatpush1.msra.mxu0 0.0
  %136 = vmatprep.subr.mxu0 0.0
  %137 = vmatpush1.msra.mxu0 0.0
  %138 = vmatprep.subr.mxu0 0.0
  %139 = vmatpush1.msra.mxu0 0.0
  %140 = vmatprep.subr.mxu0 0.0
  %141 = vmatpush1.msra.mxu0 0.0
  %142 = vmatprep.subr.mxu0 0.0
  %143 = vmatpush1.msra.mxu0 0.0
  %144 = vmatprep.subr.mxu0 0.0
  %145 = vmatpush1.msra.mxu0 0.0
  %146 = vmatprep.subr.mxu0 0.0
  %147 = vmatpush1.msra.mxu0 0.0
  %148 = vmatprep.subr.mxu0 0.0
  %149 = vmatpush1.msra.mxu0 0.0
  %150 = vmatprep.subr.mxu0 0.0
  %151 = vmatpush1.msra.mxu0 0.0
  %152 = vmatprep.subr.mxu0 0.0
  %153 = vmatpush1.msra.mxu0 0.0
  %154 = vmatprep.subr.mxu0 0.0
  %155 = vmatpush1.msra.mxu0 0.0
  %156 = vmatprep.subr.mxu0 0.0
  %157 = vmatpush1.msra.mxu0 0.0
  %158 = vmatprep.subr.mxu0 0.0
  %159 = vmatpush1.msra.mxu0 0.0
  %160 = vmatprep.subr.mxu0 0.0
  %161 = vmatpush1.msra.mxu0 0.0
  %162 = vmatprep.subr.mxu0 0.0
  %163 = vmatpush1.msra.mxu0 0.0
  %164 = vmatprep.subr.mxu0 0.0
  %165 = vmatpush1.msra.mxu0 0.0
  %166 = vmatprep.subr.mxu0 0.0
  %167 = vmatpush1.msra.mxu0 0.0
  %168 = vmatprep.subr.mxu0 0.0
  %169 = vmatpush1.msra.mxu0 0.0
  %170 = vmatprep.subr.mxu0 0.0
  %171 = vmatpush1.msra.mxu0 0.0
  %172 = vmatprep.subr.mxu0 0.0
  %173 = vmatpush1.msra.mxu0 0.0
  %174 = vmatprep.subr.mxu0 0.0
  %175 = vmatpush1.msra.mxu0 0.0
  %176 = vmatprep.subr.mxu0 0.0
  %177 = vmatpush1.msra.mxu0 0.0
  %178 = vmatprep.subr.mxu0 0.0
  %179 = vmatpush1.msra.mxu0 0.0
  %180 = vmatprep.subr.mxu0 0.0
  %181 = vmatpush1.msra.mxu0 0.0
  %182 = vmatprep.subr.mxu0 0.0
  %183 = vmatpush1.msra.mxu0 0.0
  %184 = vmatprep.subr.mxu0 0.0
  %185 = vmatpush1.msra.mxu0 0.0
  %186 = vmatprep.subr.mxu0 0.0
  %187 = vmatpush1.msra.mxu0 0.0
  %188 = vmatprep.mubr.f32.mxu0 0.0
  %189 = vmatmul.mubr.f32.gmra.mrb[0].mxu0 %v73
  %v190 = vpop.f32.mrb[0].mxu0
  %v191 = vadd.f32 %v69, %v190
  %v192 = vpop.f32.mrb[0].mxu0
  %v193 = vadd.f32 %v69, %v192
  %194 = vdwg.mxu0
  %195 = vmatprep.subr.mxu0 %v36
  %196 = vmatpush1.msra.mxu0 %v35
  %197 = vmatprep.subr.mxu0 %v86
  %198 = vmatpush1.msra.mxu0 %v83
  %199 = vmatprep.subr.mxu0 0.0
  %200 = vmatpush1.msra.mxu0 0.0
  %201 = vmatprep.subr.mxu0 0.0
  %202 = vmatpush1.msra.mxu0 0.0
  %203 = vmatprep.subr.mxu0 0.0
  %204 = vmatpush1.msra.mxu0 0.0
  %205 = vmatprep.subr.mxu0 0.0
  %206 = vmatpush1.msra.mxu0 0.0
  %207 = vmatprep.subr.mxu0 0.0
  %208 = vmatpush1.msra.mxu0 0.0
  %209 = vmatprep.subr.mxu0 0.0
  %210 = vmatpush1.msra.mxu0 0.0
  %211 = vmatprep.subr.mxu0 0.0
  %212 = vmatpush1.msra.mxu0 0.0
  %213 = vmatprep.subr.mxu0 0.0
  %214 = vmatpush1.msra.mxu0 0.0
  %215 = vmatprep.subr.mxu0 0.0
  %216 = vmatpush1.msra.mxu0 0.0
  %217 = vmatprep.subr.mxu0 0.0
  %218 = vmatpush1.msra.mxu0 0.0
  %219 = vmatprep.subr.mxu0 0.0
  %220 = vmatpush1.msra.mxu0 0.0
  %221 = vmatprep.subr.mxu0 0.0
  %222 = vmatpush1.msra.mxu0 0.0
  %223 = vmatprep.subr.mxu0 0.0
  %224 = vmatpush1.msra.mxu0 0.0
  %225 = vmatprep.subr.mxu0 0.0
  %226 = vmatpush1.msra.mxu0 0.0
  %227 = vmatprep.subr.mxu0 0.0
  %228 = vmatpush1.msra.mxu0 0.0
  %229 = vmatprep.subr.mxu0 0.0
  %230 = vmatpush1.msra.mxu0 0.0
  %231 = vmatprep.subr.mxu0 0.0
  %232 = vmatpush1.msra.mxu0 0.0
  %233 = vmatprep.subr.mxu0 0.0
  %234 = vmatpush1.msra.mxu0 0.0
  %235 = vmatprep.subr.mxu0 0.0
  %236 = vmatpush1.msra.mxu0 0.0
  %237 = vmatprep.subr.mxu0 0.0
  %238 = vmatpush1.msra.mxu0 0.0
  %239 = vmatprep.subr.mxu0 0.0
  %240 = vmatpush1.msra.mxu0 0.0
  %241 = vmatprep.subr.mxu0 0.0
  %242 = vmatpush1.msra.mxu0 0.0
  %243 = vmatprep.subr.mxu0 0.0
  %244 = vmatpush1.msra.mxu0 0.0
  %245 = vmatprep.subr.mxu0 0.0
  %246 = vmatpush1.msra.mxu0 0.0
  %247 = vmatprep.subr.mxu0 0.0
  %248 = vmatpush1.msra.mxu0 0.0
  %249 = vmatprep.subr.mxu0 0.0
  %250 = vmatpush1.msra.mxu0 0.0
  %251 = vmatprep.subr.mxu0 0.0
  %252 = vmatpush1.msra.mxu0 0.0
  %253 = vmatprep.subr.mxu0 0.0
  %254 = vmatpush1.msra.mxu0 0.0
  %255 = vmatprep.subr.mxu0 0.0
  %256 = vmatpush1.msra.mxu0 0.0
  %257 = vmatprep.subr.mxu0 0.0
  %258 = vmatpush1.msra.mxu0 0.0
  %259 = vmatprep.mubr.f32.mxu0 0.0
  %260 = vmatmul.mubr.f32.gmra.mrb[0].mxu0 %v73
  %v261 = vpop.f32.mrb[0].mxu0
  %v262 = vadd.f32 %v69, %v261
  %v263 = vpop.f32.mrb[0].mxu0
  %v264 = vadd.f32 %v69, %v263
  %265 = vdwg.mxu0
  %266 = vmatprep.subr.mxu0 %v38
  %267 = vmatpush1.msra.mxu0 %v37
  %268 = vmatprep.subr.mxu0 %v92
  %269 = vmatpush1.msra.mxu0 %v89
  %270 = vmatprep.subr.mxu0 0.0
  %271 = vmatpush1.msra.mxu0 0.0
  %272 = vmatprep.subr.mxu0 0.0
  %273 = vmatpush1.msra.mxu0 0.0
  %274 = vmatprep.subr.mxu0 0.0
  %275 = vmatpush1.msra.mxu0 0.0
  %276 = vmatprep.subr.mxu0 0.0
  %277 = vmatpush1.msra.mxu0 0.0
  %278 = vmatprep.subr.mxu0 0.0
  %279 = vmatpush1.msra.mxu0 0.0
  %280 = vmatprep.subr.mxu0 0.0
  %281 = vmatpush1.msra.mxu0 0.0
  %282 = vmatprep.subr.mxu0 0.0
  %283 = vmatpush1.msra.mxu0 0.0
  %284 = vmatprep.subr.mxu0 0.0
  %285 = vmatpush1.msra.mxu0 0.0
  %286 = vmatprep.subr.mxu0 0.0
  %287 = vmatpush1.msra.mxu0 0.0
  %288 = vmatprep.subr.mxu0 0.0
  %289 = vmatpush1.msra.mxu0 0.0
  %290 = vmatprep.subr.mxu0 0.0
  %291 = vmatpush1.msra.mxu0 0.0
  %292 = vmatprep.subr.mxu0 0.0
  %293 = vmatpush1.msra.mxu0 0.0
  %294 = vmatprep.subr.mxu0 0.0
  %295 = vmatpush1.msra.mxu0 0.0
  %296 = vmatprep.subr.mxu0 0.0
  %297 = vmatpush1.msra.mxu0 0.0
  %298 = vmatprep.subr.mxu0 0.0
  %299 = vmatpush1.msra.mxu0 0.0
  %300 = vmatprep.subr.mxu0 0.0
  %301 = vmatpush1.msra.mxu0 0.0
  %302 = vmatprep.subr.mxu0 0.0
  %303 = vmatpush1.msra.mxu0 0.0
  %304 = vmatprep.subr.mxu0 0.0
  %305 = vmatpush1.msra.mxu0 0.0
  %306 = vmatprep.subr.mxu0 0.0
  %307 = vmatpush1.msra.mxu0 0.0
  %308 = vmatprep.subr.mxu0 0.0
  %309 = vmatpush1.msra.mxu0 0.0
  %310 = vmatprep.subr.mxu0 0.0
  %311 = vmatpush1.msra.mxu0 0.0
  %312 = vmatprep.subr.mxu0 0.0
  %313 = vmatpush1.msra.mxu0 0.0
  %314 = vmatprep.subr.mxu0 0.0
  %315 = vmatpush1.msra.mxu0 0.0
  %316 = vmatprep.subr.mxu0 0.0
  %317 = vmatpush1.msra.mxu0 0.0
  %318 = vmatprep.subr.mxu0 0.0
  %319 = vmatpush1.msra.mxu0 0.0
  %320 = vmatprep.subr.mxu0 0.0
  %321 = vmatpush1.msra.mxu0 0.0
  %322 = vmatprep.subr.mxu0 0.0
  %323 = vmatpush1.msra.mxu0 0.0
  %324 = vmatprep.subr.mxu0 0.0
  %325 = vmatpush1.msra.mxu0 0.0
  %326 = vmatprep.subr.mxu0 0.0
  %327 = vmatpush1.msra.mxu0 0.0
  %328 = vmatprep.subr.mxu0 0.0
  %329 = vmatpush1.msra.mxu0 0.0
  %330 = vmatprep.mubr.f32.mxu0 0.0
  %331 = vmatmul.mubr.f32.gmra.mrb[0].mxu0 %v73
  %v332 = vpop.f32.mrb[0].mxu0
  %v333 = vadd.f32 %v69, %v332
  %v334 = vpop.f32.mrb[0].mxu0
  %v335 = vadd.f32 %v69, %v334
  %336 = vdwg.mxu0
  %337 = vmatprep.subr.mxu0 %v40
  %338 = vmatpush1.msra.mxu0 %v39
  %339 = vmatprep.subr.mxu0 %v98
  %340 = vmatpush1.msra.mxu0 %v95
  %341 = vmatprep.subr.mxu0 0.0
  %342 = vmatpush1.msra.mxu0 0.0
  %343 = vmatprep.subr.mxu0 0.0
  %344 = vmatpush1.msra.mxu0 0.0
  %345 = vmatprep.subr.mxu0 0.0
  %346 = vmatpush1.msra.mxu0 0.0
  %347 = vmatprep.subr.mxu0 0.0
  %348 = vmatpush1.msra.mxu0 0.0
  %349 = vmatprep.subr.mxu0 0.0
  %350 = vmatpush1.msra.mxu0 0.0
  %351 = vmatprep.subr.mxu0 0.0
  %352 = vmatpush1.msra.mxu0 0.0
  %353 = vmatprep.subr.mxu0 0.0
  %354 = vmatpush1.msra.mxu0 0.0
  %355 = vmatprep.subr.mxu0 0.0
  %356 = vmatpush1.msra.mxu0 0.0
  %357 = vmatprep.subr.mxu0 0.0
  %358 = vmatpush1.msra.mxu0 0.0
  %359 = vmatprep.subr.mxu0 0.0
  %360 = vmatpush1.msra.mxu0 0.0
  %361 = vmatprep.subr.mxu0 0.0
  %362 = vmatpush1.msra.mxu0 0.0
  %363 = vmatprep.subr.mxu0 0.0
  %364 = vmatpush1.msra.mxu0 0.0
  %365 = vmatprep.subr.mxu0 0.0
  %366 = vmatpush1.msra.mxu0 0.0
  %367 = vmatprep.subr.mxu0 0.0
  %368 = vmatpush1.msra.mxu0 0.0
  %369 = vmatprep.subr.mxu0 0.0
  %370 = vmatpush1.msra.mxu0 0.0
  %371 = vmatprep.subr.mxu0 0.0
  %372 = vmatpush1.msra.mxu0 0.0
  %373 = vmatprep.subr.mxu0 0.0
  %374 = vmatpush1.msra.mxu0 0.0
  %375 = vmatprep.subr.mxu0 0.0
  %376 = vmatpush1.msra.mxu0 0.0
  %377 = vmatprep.subr.mxu0 0.0
  %378 = vmatpush1.msra.mxu0 0.0
  %379 = vmatprep.subr.mxu0 0.0
  %380 = vmatpush1.msra.mxu0 0.0
  %381 = vmatprep.subr.mxu0 0.0
  %382 = vmatpush1.msra.mxu0 0.0
  %383 = vmatprep.subr.mxu0 0.0
  %384 = vmatpush1.msra.mxu0 0.0
  %385 = vmatprep.subr.mxu0 0.0
  %386 = vmatpush1.msra.mxu0 0.0
  %387 = vmatprep.subr.mxu0 0.0
  %388 = vmatpush1.msra.mxu0 0.0
  %389 = vmatprep.subr.mxu0 0.0
  %390 = vmatpush1.msra.mxu0 0.0
  %391 = vmatprep.subr.mxu0 0.0
  %392 = vmatpush1.msra.mxu0 0.0
  %393 = vmatprep.subr.mxu0 0.0
  %394 = vmatpush1.msra.mxu0 0.0
  %395 = vmatprep.subr.mxu0 0.0
  %396 = vmatpush1.msra.mxu0 0.0
  %397 = vmatprep.subr.mxu0 0.0
  %398 = vmatpush1.msra.mxu0 0.0
  %399 = vmatprep.subr.mxu0 0.0
  %400 = vmatpush1.msra.mxu0 0.0
  %401 = vmatprep.mubr.f32.mxu0 0.0
  %402 = vmatmul.mubr.f32.gmra.mrb[0].mxu0 %v73
  %v403 = vpop.f32.mrb[0].mxu0
  %v404 = vadd.f32 %v69, %v403
  %v405 = vpop.f32.mrb[0].mxu0
  %v406 = vadd.f32 %v69, %v405
  %407 = vdwg.mxu0
  %408 = vmatprep.subr.mxu0 %v42
  %409 = vmatpush1.msra.mxu0 %v41
  %410 = vmatprep.subr.mxu0 %v104
  %411 = vmatpush1.msra.mxu0 %v101
  %412 = vmatprep.subr.mxu0 0.0
  %413 = vmatpush1.msra.mxu0 0.0
  %414 = vmatprep.subr.mxu0 0.0
  %415 = vmatpush1.msra.mxu0 0.0
  %416 = vmatprep.subr.mxu0 0.0
  %417 = vmatpush1.msra.mxu0 0.0
  %418 = vmatprep.subr.mxu0 0.0
  %419 = vmatpush1.msra.mxu0 0.0
  %420 = vmatprep.subr.mxu0 0.0
  %421 = vmatpush1.msra.mxu0 0.0
  %422 = vmatprep.subr.mxu0 0.0
  %423 = vmatpush1.msra.mxu0 0.0
  %424 = vmatprep.subr.mxu0 0.0
  %425 = vmatpush1.msra.mxu0 0.0
  %426 = vmatprep.subr.mxu0 0.0
  %427 = vmatpush1.msra.mxu0 0.0
  %428 = vmatprep.subr.mxu0 0.0
  %429 = vmatpush1.msra.mxu0 0.0
  %430 = vmatprep.subr.mxu0 0.0
  %431 = vmatpush1.msra.mxu0 0.0
  %432 = vmatprep.subr.mxu0 0.0
  %433 = vmatpush1.msra.mxu0 0.0
  %434 = vmatprep.subr.mxu0 0.0
  %435 = vmatpush1.msra.mxu0 0.0
  %436 = vmatprep.subr.mxu0 0.0
  %437 = vmatpush1.msra.mxu0 0.0
  %438 = vmatprep.subr.mxu0 0.0
  %439 = vmatpush1.msra.mxu0 0.0
  %440 = vmatprep.subr.mxu0 0.0
  %441 = vmatpush1.msra.mxu0 0.0
  %442 = vmatprep.subr.mxu0 0.0
  %443 = vmatpush1.msra.mxu0 0.0
  %444 = vmatprep.subr.mxu0 0.0
  %445 = vmatpush1.msra.mxu0 0.0
  %446 = vmatprep.subr.mxu0 0.0
  %447 = vmatpush1.msra.mxu0 0.0
  %448 = vmatprep.subr.mxu0 0.0
  %449 = vmatpush1.msra.mxu0 0.0
  %450 = vmatprep.subr.mxu0 0.0
  %451 = vmatpush1.msra.mxu0 0.0
  %452 = vmatprep.subr.mxu0 0.0
  %453 = vmatpush1.msra.mxu0 0.0
  %454 = vmatprep.subr.mxu0 0.0
  %455 = vmatpush1.msra.mxu0 0.0
  %456 = vmatprep.subr.mxu0 0.0
  %457 = vmatpush1.msra.mxu0 0.0
  %458 = vmatprep.subr.mxu0 0.0
  %459 = vmatpush1.msra.mxu0 0.0
  %460 = vmatprep.subr.mxu0 0.0
  %461 = vmatpush1.msra.mxu0 0.0
  %462 = vmatprep.subr.mxu0 0.0
  %463 = vmatpush1.msra.mxu0 0.0
  %464 = vmatprep.subr.mxu0 0.0
  %465 = vmatpush1.msra.mxu0 0.0
  %466 = vmatprep.subr.mxu0 0.0
  %467 = vmatpush1.msra.mxu0 0.0
  %468 = vmatprep.subr.mxu0 0.0
  %469 = vmatpush1.msra.mxu0 0.0
  %470 = vmatprep.subr.mxu0 0.0
  %471 = vmatpush1.msra.mxu0 0.0
  %472 = vmatprep.mubr.f32.mxu0 0.0
  %473 = vmatmul.mubr.f32.gmra.mrb[0].mxu0 %v73
  %v474 = vpop.f32.mrb[0].mxu0
  %v475 = vadd.f32 %v69, %v474
  %v476 = vpop.f32.mrb[0].mxu0
  %v477 = vadd.f32 %v69, %v476
  %478 = vdwg.mxu0
  %479 = vmatprep.subr.mxu0 %v44
  %480 = vmatpush1.msra.mxu0 %v43
  %481 = vmatprep.subr.mxu0 %v110
  %482 = vmatpush1.msra.mxu0 %v107
  %483 = vmatprep.subr.mxu0 0.0
  %484 = vmatpush1.msra.mxu0 0.0
  %485 = vmatprep.subr.mxu0 0.0
  %486 = vmatpush1.msra.mxu0 0.0
  %487 = vmatprep.subr.mxu0 0.0
  %488 = vmatpush1.msra.mxu0 0.0
  %489 = vmatprep.subr.mxu0 0.0
  %490 = vmatpush1.msra.mxu0 0.0
  %491 = vmatprep.subr.mxu0 0.0
  %492 = vmatpush1.msra.mxu0 0.0
  %493 = vmatprep.subr.mxu0 0.0
  %494 = vmatpush1.msra.mxu0 0.0
  %495 = vmatprep.subr.mxu0 0.0
  %496 = vmatpush1.msra.mxu0 0.0
  %497 = vmatprep.subr.mxu0 0.0
  %498 = vmatpush1.msra.mxu0 0.0
  %499 = vmatprep.subr.mxu0 0.0
  %500 = vmatpush1.msra.mxu0 0.0
  %501 = vmatprep.subr.mxu0 0.0
  %502 = vmatpush1.msra.mxu0 0.0
  %503 = vmatprep.subr.mxu0 0.0
  %504 = vmatpush1.msra.mxu0 0.0
  %505 = vmatprep.subr.mxu0 0.0
  %506 = vmatpush1.msra.mxu0 0.0
  %507 = vmatprep.subr.mxu0 0.0
  %508 = vmatpush1.msra.mxu0 0.0
  %509 = vmatprep.subr.mxu0 0.0
  %510 = vmatpush1.msra.mxu0 0.0
  %511 = vmatprep.subr.mxu0 0.0
  %512 = vmatpush1.msra.mxu0 0.0
  %513 = vmatprep.subr.mxu0 0.0
  %514 = vmatpush1.msra.mxu0 0.0
  %515 = vmatprep.subr.mxu0 0.0
  %516 = vmatpush1.msra.mxu0 0.0
  %517 = vmatprep.subr.mxu0 0.0
  %518 = vmatpush1.msra.mxu0 0.0
  %519 = vmatprep.subr.mxu0 0.0
  %520 = vmatpush1.msra.mxu0 0.0
  %521 = vmatprep.subr.mxu0 0.0
  %522 = vmatpush1.msra.mxu0 0.0
  %523 = vmatprep.subr.mxu0 0.0
  %524 = vmatpush1.msra.mxu0 0.0
  %525 = vmatprep.subr.mxu0 0.0
  %526 = vmatpush1.msra.mxu0 0.0
  %527 = vmatprep.subr.mxu0 0.0
  %528 = vmatpush1.msra.mxu0 0.0
  %529 = vmatprep.subr.mxu0 0.0
  %530 = vmatpush1.msra.mxu0 0.0
  %531 = vmatprep.subr.mxu0 0.0
  %532 = vmatpush1.msra.mxu0 0.0
  %533 = vmatprep.subr.mxu0 0.0
  %534 = vmatpush1.msra.mxu0 0.0
  %535 = vmatprep.subr.mxu0 0.0
  %536 = vmatpush1.msra.mxu0 0.0
  %537 = vmatprep.subr.mxu0 0.0
  %538 = vmatpush1.msra.mxu0 0.0
  %539 = vmatprep.subr.mxu0 0.0
  %540 = vmatpush1.msra.mxu0 0.0
  %541 = vmatprep.subr.mxu0 0.0
  %542 = vmatpush1.msra.mxu0 0.0
  %543 = vmatprep.mubr.f32.mxu0 0.0
  %544 = vmatmul.mubr.f32.gmra.mrb[0].mxu0 %v73
  %v545 = vpop.f32.mrb[0].mxu0
  %v546 = vadd.f32 %v69, %v545
  %v547 = vpop.f32.mrb[0].mxu0
  %v548 = vadd.f32 %v69, %v547
  %549 = vdwg.mxu0
  %550 = vmatprep.subr.mxu0 %v46
  %551 = vmatpush1.msra.mxu0 %v45
  %552 = vmatprep.subr.mxu0 %v116
  %553 = vmatpush1.msra.mxu0 %v113
  %554 = vmatprep.subr.mxu0 0.0
  %555 = vmatpush1.msra.mxu0 0.0
  %556 = vmatprep.subr.mxu0 0.0
  %557 = vmatpush1.msra.mxu0 0.0
  %558 = vmatprep.subr.mxu0 0.0
  %559 = vmatpush1.msra.mxu0 0.0
  %560 = vmatprep.subr.mxu0 0.0
  %561 = vmatpush1.msra.mxu0 0.0
  %562 = vmatprep.subr.mxu0 0.0
  %563 = vmatpush1.msra.mxu0 0.0
  %564 = vmatprep.subr.mxu0 0.0
  %565 = vmatpush1.msra.mxu0 0.0
  %566 = vmatprep.subr.mxu0 0.0
  %567 = vmatpush1.msra.mxu0 0.0
  %568 = vmatprep.subr.mxu0 0.0
  %569 = vmatpush1.msra.mxu0 0.0
  %570 = vmatprep.subr.mxu0 0.0
  %571 = vmatpush1.msra.mxu0 0.0
  %572 = vmatprep.subr.mxu0 0.0
  %573 = vmatpush1.msra.mxu0 0.0
  %574 = vmatprep.subr.mxu0 0.0
  %575 = vmatpush1.msra.mxu0 0.0
  %576 = vmatprep.subr.mxu0 0.0
  %577 = vmatpush1.msra.mxu0 0.0
  %578 = vmatprep.subr.mxu0 0.0
  %579 = vmatpush1.msra.mxu0 0.0
  %580 = vmatprep.subr.mxu0 0.0
  %581 = vmatpush1.msra.mxu0 0.0
  %582 = vmatprep.subr.mxu0 0.0
  %583 = vmatpush1.msra.mxu0 0.0
  %584 = vmatprep.subr.mxu0 0.0
  %585 = vmatpush1.msra.mxu0 0.0
  %586 = vmatprep.subr.mxu0 0.0
  %587 = vmatpush1.msra.mxu0 0.0
  %588 = vmatprep.subr.mxu0 0.0
  %589 = vmatpush1.msra.mxu0 0.0
  %590 = vmatprep.subr.mxu0 0.0
  %591 = vmatpush1.msra.mxu0 0.0
  %592 = vmatprep.subr.mxu0 0.0
  %593 = vmatpush1.msra.mxu0 0.0
  %594 = vmatprep.subr.mxu0 0.0
  %595 = vmatpush1.msra.mxu0 0.0
  %596 = vmatprep.subr.mxu0 0.0
  %597 = vmatpush1.msra.mxu0 0.0
  %598 = vmatprep.subr.mxu0 0.0
  %599 = vmatpush1.msra.mxu0 0.0
  %600 = vmatprep.subr.mxu0 0.0
  %601 = vmatpush1.msra.mxu0 0.0
  %602 = vmatprep.subr.mxu0 0.0
  %603 = vmatpush1.msra.mxu0 0.0
  %604 = vmatprep.subr.mxu0 0.0
  %605 = vmatpush1.msra.mxu0 0.0
  %606 = vmatprep.subr.mxu0 0.0
  %607 = vmatpush1.msra.mxu0 0.0
  %608 = vmatprep.subr.mxu0 0.0
  %609 = vmatpush1.msra.mxu0 0.0
  %610 = vmatprep.subr.mxu0 0.0
  %611 = vmatpush1.msra.mxu0 0.0
  %612 = vmatprep.subr.mxu0 0.0
  %613 = vmatpush1.msra.mxu0 0.0
  %614 = vmatprep.mubr.f32.mxu0 0.0
  %615 = vmatmul.mubr.f32.gmra.mrb[0].mxu0 %v73
  %v616 = vpop.f32.mrb[0].mxu0
  %v617 = vadd.f32 %v69, %v616
  %v618 = vpop.f32.mrb[0].mxu0
  %v619 = vadd.f32 %v69, %v618
  %620 = vdwg.mxu0
  %621 = vmatprep.subr.mxu0 %v48
  %622 = vmatpush1.msra.mxu0 %v47
  %623 = vmatprep.subr.mxu0 %v122
  %624 = vmatpush1.msra.mxu0 %v119
  %625 = vmatprep.subr.mxu0 0.0
  %626 = vmatpush1.msra.mxu0 0.0
  %627 = vmatprep.subr.mxu0 0.0
  %628 = vmatpush1.msra.mxu0 0.0
  %629 = vmatprep.subr.mxu0 0.0
  %630 = vmatpush1.msra.mxu0 0.0
  %631 = vmatprep.subr.mxu0 0.0
  %632 = vmatpush1.msra.mxu0 0.0
  %633 = vmatprep.subr.mxu0 0.0
  %634 = vmatpush1.msra.mxu0 0.0
  %635 = vmatprep.subr.mxu0 0.0
  %636 = vmatpush1.msra.mxu0 0.0
  %637 = vmatprep.subr.mxu0 0.0
  %638 = vmatpush1.msra.mxu0 0.0
  %639 = vmatprep.subr.mxu0 0.0
  %640 = vmatpush1.msra.mxu0 0.0
  %641 = vmatprep.subr.mxu0 0.0
  %642 = vmatpush1.msra.mxu0 0.0
  %643 = vmatprep.subr.mxu0 0.0
  %644 = vmatpush1.msra.mxu0 0.0
  %645 = vmatprep.subr.mxu0 0.0
  %646 = vmatpush1.msra.mxu0 0.0
  %647 = vmatprep.subr.mxu0 0.0
  %648 = vmatpush1.msra.mxu0 0.0
  %649 = vmatprep.subr.mxu0 0.0
  %650 = vmatpush1.msra.mxu0 0.0
  %651 = vmatprep.subr.mxu0 0.0
  %652 = vmatpush1.msra.mxu0 0.0
  %653 = vmatprep.subr.mxu0 0.0
  %654 = vmatpush1.msra.mxu0 0.0
  %655 = vmatprep.subr.mxu0 0.0
  %656 = vmatpush1.msra.mxu0 0.0
  %657 = vmatprep.subr.mxu0 0.0
  %658 = vmatpush1.msra.mxu0 0.0
  %659 = vmatprep.subr.mxu0 0.0
  %660 = vmatpush1.msra.mxu0 0.0
  %661 = vmatprep.subr.mxu0 0.0
  %662 = vmatpush1.msra.mxu0 0.0
  %663 = vmatprep.subr.mxu0 0.0
  %664 = vmatpush1.msra.mxu0 0.0
  %665 = vmatprep.subr.mxu0 0.0
  %666 = vmatpush1.msra.mxu0 0.0
  %667 = vmatprep.subr.mxu0 0.0
  %668 = vmatpush1.msra.mxu0 0.0
  %669 = vmatprep.subr.mxu0 0.0
  %670 = vmatpush1.msra.mxu0 0.0
  %671 = vmatprep.subr.mxu0 0.0
  %672 = vmatpush1.msra.mxu0 0.0
  %673 = vmatprep.subr.mxu0 0.0
  %674 = vmatpush1.msra.mxu0 0.0
  %675 = vmatprep.subr.mxu0 0.0
  %676 = vmatpush1.msra.mxu0 0.0
  %677 = vmatprep.subr.mxu0 0.0
  %678 = vmatpush1.msra.mxu0 0.0
  %679 = vmatprep.subr.mxu0 0.0
  %680 = vmatpush1.msra.mxu0 0.0
  %681 = vmatprep.subr.mxu0 0.0
  %682 = vmatpush1.msra.mxu0 0.0
  %683 = vmatprep.subr.mxu0 0.0
  %684 = vmatpush1.msra.mxu0 0.0
  %685 = vmatprep.mubr.f32.mxu0 0.0
  %686 = vmatmul.mubr.f32.gmra.mrb[0].mxu0 %v73
  %v687 = vpop.f32.mrb[0].mxu0
  %v688 = vadd.f32 %v69, %v687
  %v689 = vpop.f32.mrb[0].mxu0
  %v690 = vadd.f32 %v69, %v689
  %691 = vdwg.mxu0
  %v692 = vmax.f32 %v191, 0.0
  %v693 = vmax.f32 %v193, 0.0
  %v694 = vmax.f32 %v262, 0.0
  %v695 = vmax.f32 %v264, 0.0
  %v696 = vmax.f32 %v333, 0.0
  %v697 = vmax.f32 %v335, 0.0
  %v698 = vmax.f32 %v404, 0.0
  %v699 = vmax.f32 %v406, 0.0
  %v700 = vmax.f32 %v475, 0.0
  %v701 = vmax.f32 %v477, 0.0
  %v702 = vmax.f32 %v546, 0.0
  %v703 = vmax.f32 %v548, 0.0
  %v704 = vmax.f32 %v617, 0.0
  %v705 = vmax.f32 %v619, 0.0
  %v706 = vmax.f32 %v688, 0.0
  %v707 = vmax.f32 %v690, 0.0
  %v708 = vmax.f32 %v692, %v693
  %v709 = vmax.f32 %v708, %v694
  %v710 = vmax.f32 %v709, %v695
  %v711 = vmax.f32 %v696, %v697
  %v712 = vmax.f32 %v711, %v698
  %v713 = vmax.f32 %v712, %v699
  %v714 = vmax.f32 %v700, %v701
  %v715 = vmax.f32 %v714, %v702
  %v716 = vmax.f32 %v715, %v703
  %v717 = vmax.f32 %v704, %v705
  %v718 = vmax.f32 %v717, %v706
  %v719 = vmax.f32 %v718, %v707
  %721 = vrot.lane.b32.xlu0 %v710, 126
  %v722 = vpop.permute.xlu0 %721
  %725 = vrot.lane.b32.xlu0 %v716, 126
  %v726 = vpop.permute.xlu0 %725
  %728 = vrot.lane.b32.xlu0 %v710, 114
  %v729 = vpop.permute.xlu0 %728
  %732 = vrot.lane.b32.xlu0 %v713, 114
  %v733 = vpop.permute.xlu0 %732
  %735 = vrot.lane.b32.xlu0 %v710, 112
  %v736 = vpop.permute.xlu0 %735
  %v738 = vld [vmem:[%s3] sm:$0xff]
  %v739 = vld [vmem:[%s4] sm:$0xff]
  %741 = vset.pattern.permute.xlu0 0
  %742 = vperm.xlu0 %741, %v739
  %v743 = vpop.permute.xlu0 %742
  %vm745 = vcmask 588800
  %v747 = vsel %vm745, %v738, 0
  %749 = vmatprep.subr.mxu0 0.0
  %750 = vmatpush1.msra.mxu0 %v710
  %751 = vmatprep.subr.mxu0 0.0
  %752 = vmatpush1.msra.mxu0 %v713
  %753 = vmatprep.subr.mxu0 0.0
  %754 = vmatpush1.msra.mxu0 %v722
  %755 = vmatprep.subr.mxu0 0.0
  %756 = vmatpush1.msra.mxu0 %v716
  %757 = vmatprep.subr.mxu0 0.0
  %758 = vmatpush1.msra.mxu0 %v719
  %759 = vmatprep.subr.mxu0 0.0
  %760 = vmatpush1.msra.mxu0 %v726
  %761 = vmatprep.subr.mxu0 0.0
  %762 = vmatpush1.msra.mxu0 %v729
  %763 = vmatprep.subr.mxu0 0.0
  %764 = vmatpush1.msra.mxu0 %v733
  %765 = vmatprep.subr.mxu0 0.0
  %766 = vmatpush1.msra.mxu0 %v736
  %767 = vmatprep.subr.mxu0 0.0
  %768 = vmatpush1.msra.mxu0 0.0
  %769 = vmatprep.subr.mxu0 0.0
  %770 = vmatpush1.msra.mxu0 0.0
  %771 = vmatprep.subr.mxu0 0.0
  %772 = vmatpush1.msra.mxu0 0.0
  %773 = vmatprep.subr.mxu0 0.0
  %774 = vmatpush1.msra.mxu0 0.0
  %775 = vmatprep.subr.mxu0 0.0
  %776 = vmatpush1.msra.mxu0 0.0
  %777 = vmatprep.subr.mxu0 0.0
  %778 = vmatpush1.msra.mxu0 0.0
  %779 = vmatprep.subr.mxu0 0.0
  %780 = vmatpush1.msra.mxu0 0.0
  %781 = vmatprep.subr.mxu0 0.0
  %782 = vmatpush1.msra.mxu0 0.0
  %783 = vmatprep.subr.mxu0 0.0
  %784 = vmatpush1.msra.mxu0 0.0
  %785 = vmatprep.subr.mxu0 0.0
  %786 = vmatpush1.msra.mxu0 0.0
  %787 = vmatprep.subr.mxu0 0.0
  %788 = vmatpush1.msra.mxu0 0.0
  %789 = vmatprep.subr.mxu0 0.0
  %790 = vmatpush1.msra.mxu0 0.0
  %791 = vmatprep.subr.mxu0 0.0
  %792 = vmatpush1.msra.mxu0 0.0
  %793 = vmatprep.subr.mxu0 0.0
  %794 = vmatpush1.msra.mxu0 0.0
  %795 = vmatprep.subr.mxu0 0.0
  %796 = vmatpush1.msra.mxu0 0.0
  %797 = vmatprep.subr.mxu0 0.0
  %798 = vmatpush1.msra.mxu0 0.0
  %799 = vmatprep.subr.mxu0 0.0
  %800 = vmatpush1.msra.mxu0 0.0
  %801 = vmatprep.subr.mxu0 0.0
  %802 = vmatpush1.msra.mxu0 0.0
  %803 = vmatprep.subr.mxu0 0.0
  %804 = vmatpush1.msra.mxu0 0.0
  %805 = vmatprep.subr.mxu0 0.0
  %806 = vmatpush1.msra.mxu0 0.0
  %807 = vmatprep.subr.mxu0 0.0
  %808 = vmatpush1.msra.mxu0 0.0
  %809 = vmatprep.subr.mxu0 0.0
  %810 = vmatpush1.msra.mxu0 0.0
  %811 = vmatprep.subr.mxu0 0.0
  %812 = vmatpush1.msra.mxu0 0.0
  %813 = vmatprep.mubr.f32.mxu0 0.0
  %814 = vmatmul.mubr.f32.gmra.mrb[0].mxu0 %v747
  %v815 = vpop.f32.mrb[0].mxu0
  %v816 = vadd.f32 %v743, %v815
  %v817 = vpop.f32.mrb[0].mxu0
  %818 = vdwg.mxu0
  %v819 = vmax.f32 %v816, 0.0
  %820 = vrot.lane.b32.xlu0 %v713, 126
  %v821 = vpop.permute.xlu0 %820
  %824 = vrot.lane.b32.xlu0 %v719, 126
  %v825 = vpop.permute.xlu0 %824
  %827 = vrot.lane.b32.xlu0 %v713, 112
  %v828 = vpop.permute.xlu0 %827
  %830 = vmatprep.subr.mxu0 0.0
  %831 = vmatpush1.msra.mxu0 %v713
  %832 = vmatprep.subr.mxu0 0.0
  %833 = vmatpush1.msra.mxu0 %v722
  %834 = vmatprep.subr.mxu0 0.0
  %835 = vmatpush1.msra.mxu0 %v821
  %836 = vmatprep.subr.mxu0 0.0
  %837 = vmatpush1.msra.mxu0 %v719
  %838 = vmatprep.subr.mxu0 0.0
  %839 = vmatpush1.msra.mxu0 %v726
  %840 = vmatprep.subr.mxu0 0.0
  %841 = vmatpush1.msra.mxu0 %v825
  %842 = vmatprep.subr.mxu0 0.0
  %843 = vmatpush1.msra.mxu0 %v733
  %844 = vmatprep.subr.mxu0 0.0
  %845 = vmatpush1.msra.mxu0 %v736
  %846 = vmatprep.subr.mxu0 0.0
  %847 = vmatpush1.msra.mxu0 %v828
  %848 = vmatprep.subr.mxu0 0.0
  %849 = vmatpush1.msra.mxu0 0.0
  %850 = vmatprep.subr.mxu0 0.0
  %851 = vmatpush1.msra.mxu0 0.0
  %852 = vmatprep.subr.mxu0 0.0
  %853 = vmatpush1.msra.mxu0 0.0
  %854 = vmatprep.subr.mxu0 0.0
  %855 = vmatpush1.msra.mxu0 0.0
  %856 = vmatprep.subr.mxu0 0.0
  %857 = vmatpush1.msra.mxu0 0.0
  %858 = vmatprep.subr.mxu0 0.0
  %859 = vmatpush1.msra.mxu0 0.0
  %860 = vmatprep.subr.mxu0 0.0
  %861 = vmatpush1.msra.mxu0 0.0
  %862 = vmatprep.subr.mxu0 0.0
  %863 = vmatpush1.msra.mxu0 0.0
  %864 = vmatprep.subr.mxu0 0.0
  %865 = vmatpush1.msra.mxu0 0.0
  %866 = vmatprep.subr.mxu0 0.0
  %867 = vmatpush1.msra.mxu0 0.0
  %868 = vmatprep.subr.mxu0 0.0
  %869 = vmatpush1.msra.mxu0 0.0
  %870 = vmatprep.subr.mxu0 0.0
  %871 = vmatpush1.msra.mxu0 0.0
  %872 = vmatprep.subr.mxu0 0.0
  %873 = vmatpush1.msra.mxu0 0.0
  %874 = vmatprep.subr.mxu0 0.0
  %875 = vmatpush1.msra.mxu0 0.0
  %876 = vmatprep.subr.mxu0 0.0
  %877 = vmatpush1.msra.mxu0 0.0
  %878 = vmatprep.subr.mxu0 0.0
  %879 = vmatpush1.msra.mxu0 0.0
  %880 = vmatprep.subr.mxu0 0.0
  %881 = vmatpush1.msra.mxu0 0.0
  %882 = vmatprep.subr.mxu0 0.0
  %883 = vmatpush1.msra.mxu0 0.0
  %884 = vmatprep.subr.mxu0 0.0
  %885 = vmatpush1.msra.mxu0 0.0
  %886 = vmatprep.subr.mxu0 0.0
  %887 = vmatpush1.msra.mxu0 0.0
  %888 = vmatprep.subr.mxu0 0.0
  %889 = vmatpush1.msra.mxu0 0.0
  %890 = vmatprep.subr.mxu0 0.0
  %891 = vmatpush1.msra.mxu0 0.0
  %892 = vmatprep.subr.mxu0 0.0
  %893 = vmatpush1.msra.mxu0 0.0
  %894 = vmatprep.mubr.f32.mxu0 0.0
  %895 = vmatmul.mubr.f32.gmra.mrb[0].mxu0 %v747
  %v896 = vpop.f32.mrb[0].mxu0
  %v897 = vadd.f32 %v743, %v896
  %v898 = vpop.f32.mrb[0].mxu0
  %899 = vdwg.mxu0
  %v900 = vmax.f32 %v897, 0.0
  %v901 = vmax.f32 %v819, %v900
  %902 = vrot.lane.b32.xlu0 %v716, 114
  %v903 = vpop.permute.xlu0 %902
  %905 = vrot.lane.b32.xlu0 %v719, 114
  %v906 = vpop.permute.xlu0 %905
  %908 = vrot.lane.b32.xlu0 %v716, 112
  %v909 = vpop.permute.xlu0 %908
  %911 = vmatprep.subr.mxu0 0.0
  %912 = vmatpush1.msra.mxu0 %v716
  %913 = vmatprep.subr.mxu0 0.0
  %914 = vmatpush1.msra.mxu0 %v719
  %915 = vmatprep.subr.mxu0 0.0
  %916 = vmatpush1.msra.mxu0 %v726
  %917 = vmatprep.subr.mxu0 0.0
  %918 = vmatpush1.msra.mxu0 %v729
  %919 = vmatprep.subr.mxu0 0.0
  %920 = vmatpush1.msra.mxu0 %v733
  %921 = vmatprep.subr.mxu0 0.0
  %922 = vmatpush1.msra.mxu0 %v736
  %923 = vmatprep.subr.mxu0 0.0
  %924 = vmatpush1.msra.mxu0 %v903
  %925 = vmatprep.subr.mxu0 0.0
  %926 = vmatpush1.msra.mxu0 %v906
  %927 = vmatprep.subr.mxu0 0.0
  %928 = vmatpush1.msra.mxu0 %v909
  %929 = vmatprep.subr.mxu0 0.0
  %930 = vmatpush1.msra.mxu0 0.0
  %931 = vmatprep.subr.mxu0 0.0
  %932 = vmatpush1.msra.mxu0 0.0
  %933 = vmatprep.subr.mxu0 0.0
  %934 = vmatpush1.msra.mxu0 0.0
  %935 = vmatprep.subr.mxu0 0.0
  %936 = vmatpush1.msra.mxu0 0.0
  %937 = vmatprep.subr.mxu0 0.0
  %938 = vmatpush1.msra.mxu0 0.0
  %939 = vmatprep.subr.mxu0 0.0
  %940 = vmatpush1.msra.mxu0 0.0
  %941 = vmatprep.subr.mxu0 0.0
  %942 = vmatpush1.msra.mxu0 0.0
  %943 = vmatprep.subr.mxu0 0.0
  %944 = vmatpush1.msra.mxu0 0.0
  %945 = vmatprep.subr.mxu0 0.0
  %946 = vmatpush1.msra.mxu0 0.0
  %947 = vmatprep.subr.mxu0 0.0
  %948 = vmatpush1.msra.mxu0 0.0
  %949 = vmatprep.subr.mxu0 0.0
  %950 = vmatpush1.msra.mxu0 0.0
  %951 = vmatprep.subr.mxu0 0.0
  %952 = vmatpush1.msra.mxu0 0.0
  %953 = vmatprep.subr.mxu0 0.0
  %954 = vmatpush1.msra.mxu0 0.0
  %955 = vmatprep.subr.mxu0 0.0
  %956 = vmatpush1.msra.mxu0 0.0
  %957 = vmatprep.subr.mxu0 0.0
  %958 = vmatpush1.msra.mxu0 0.0
  %959 = vmatprep.subr.mxu0 0.0
  %960 = vmatpush1.msra.mxu0 0.0
  %961 = vmatprep.subr.mxu0 0.0
  %962 = vmatpush1.msra.mxu0 0.0
  %963 = vmatprep.subr.mxu0 0.0
  %964 = vmatpush1.msra.mxu0 0.0
  %965 = vmatprep.subr.mxu0 0.0
  %966 = vmatpush1.msra.mxu0 0.0
  %967 = vmatprep.subr.mxu0 0.0
  %968 = vmatpush1.msra.mxu0 0.0
  %969 = vmatprep.subr.mxu0 0.0
  %970 = vmatpush1.msra.mxu0 0.0
  %971 = vmatprep.subr.mxu0 0.0
  %972 = vmatpush1.msra.mxu0 0.0
  %973 = vmatprep.subr.mxu0 0.0
  %974 = vmatpush1.msra.mxu0 0.0
  %975 = vmatprep.mubr.f32.mxu0 0.0
  %976 = vmatmul.mubr.f32.gmra.mrb[0].mxu0 %v747
  %v977 = vpop.f32.mrb[0].mxu0
  %v978 = vadd.f32 %v743, %v977
  %v979 = vpop.f32.mrb[0].mxu0
  %980 = vdwg.mxu0
  %v981 = vmax.f32 %v978, 0.0
  %v982 = vmax.f32 %v901, %v981
  %983 = vrot.lane.b32.xlu0 %v719, 112
  %v984 = vpop.permute.xlu0 %983
  %986 = vmatprep.subr.mxu0 0.0
  %987 = vmatpush1.msra.mxu0 %v719
  %988 = vmatprep.subr.mxu0 0.0
  %989 = vmatpush1.msra.mxu0 %v726
  %990 = vmatprep.subr.mxu0 0.0
  %991 = vmatpush1.msra.mxu0 %v825
  %992 = vmatprep.subr.mxu0 0.0
  %993 = vmatpush1.msra.mxu0 %v733
  %994 = vmatprep.subr.mxu0 0.0
  %995 = vmatpush1.msra.mxu0 %v736
  %996 = vmatprep.subr.mxu0 0.0
  %997 = vmatpush1.msra.mxu0 %v828
  %998 = vmatprep.subr.mxu0 0.0
  %999 = vmatpush1.msra.mxu0 %v906
  %1000 = vmatprep.subr.mxu0 0.0
  %1001 = vmatpush1.msra.mxu0 %v909
  %1002 = vmatprep.subr.mxu0 0.0
  %1003 = vmatpush1.msra.mxu0 %v984
  %1004 = vmatprep.subr.mxu0 0.0
  %1005 = vmatpush1.msra.mxu0 0.0
  %1006 = vmatprep.subr.mxu0 0.0
  %1007 = vmatpush1.msra.mxu0 0.0
  %1008 = vmatprep.subr.mxu0 0.0
  %1009 = vmatpush1.msra.mxu0 0.0
  %1010 = vmatprep.subr.mxu0 0.0
  %1011 = vmatpush1.msra.mxu0 0.0
  %1012 = vmatprep.subr.mxu0 0.0
  %1013 = vmatpush1.msra.mxu0 0.0
  %1014 = vmatprep.subr.mxu0 0.0
  %1015 = vmatpush1.msra.mxu0 0.0
  %1016 = vmatprep.subr.mxu0 0.0
  %1017 = vmatpush1.msra.mxu0 0.0
  %1018 = vmatprep.subr.mxu0 0.0
  %1019 = vmatpush1.msra.mxu0 0.0
  %1020 = vmatprep.subr.mxu0 0.0
  %1021 = vmatpush1.msra.mxu0 0.0
  %1022 = vmatprep.subr.mxu0 0.0
  %1023 = vmatpush1.msra.mxu0 0.0
  %1024 = vmatprep.subr.mxu0 0.0
  %1025 = vmatpush1.msra.mxu0 0.0
  %1026 = vmatprep.subr.mxu0 0.0
  %1027 = vmatpush1.msra.mxu0 0.0
  %1028 = vmatprep.subr.mxu0 0.0
  %1029 = vmatpush1.msra.mxu0 0.0
  %1030 = vmatprep.subr.mxu0 0.0
  %1031 = vmatpush1.msra.mxu0 0.0
  %1032 = vmatprep.subr.mxu0 0.0
  %1033 = vmatpush1.msra.mxu0 0.0
  %1034 = vmatprep.subr.mxu0 0.0
  %1035 = vmatpush1.msra.mxu0 0.0
  %1036 = vmatprep.subr.mxu0 0.0
  %1037 = vmatpush1.msra.mxu0 0.0
  %1038 = vmatprep.subr.mxu0 0.0
  %1039 = vmatpush1.msra.mxu0 0.0
  %1040 = vmatprep.subr.mxu0 0.0
  %1041 = vmatpush1.msra.mxu0 0.0
  %1042 = vmatprep.subr.mxu0 0.0
  %1043 = vmatpush1.msra.mxu0 0.0
  %1044 = vmatprep.subr.mxu0 0.0
  %1045 = vmatpush1.msra.mxu0 0.0
  %1046 = vmatprep.subr.mxu0 0.0
  %1047 = vmatpush1.msra.mxu0 0.0
  %1048 = vmatprep.subr.mxu0 0.0
  %1049 = vmatpush1.msra.mxu0 0.0
  %1050 = vmatprep.mubr.f32.mxu0 0.0
  %1051 = vmatmul.mubr.f32.gmra.mrb[0].mxu0 %v747
  %v1052 = vpop.f32.mrb[0].mxu0
  %v1053 = vadd.f32 %v743, %v1052
  %v1054 = vpop.f32.mrb[0].mxu0
  %1055 = vdwg.mxu0
  %v1056 = vmax.f32 %v1053, 0.0
  %v1057 = vmax.f32 %v982, %v1056
  %1059 = vrot.lane.b32.xlu0 %v1057, 126
  %v1060 = vpop.permute.xlu0 %1059
  %1062 = vrot.lane.b32.xlu0 %v1057, 124
  %v1063 = vpop.permute.xlu0 %1062
  %1065 = vrot.lane.b32.xlu0 %v1057, 122
  %v1066 = vpop.permute.xlu0 %1065
  %1068 = vrot.lane.b32.xlu0 %v1057, 120
  %v1069 = vpop.permute.xlu0 %1068
  %1071 = vrot.lane.b32.xlu0 %v1057, 114
  %v1072 = vpop.permute.xlu0 %1071
  %1074 = vrot.lane.b32.xlu0 %v1057, 112
  %v1075 = vpop.permute.xlu0 %1074
  %1077 = vrot.lane.b32.xlu0 %v1057, 110
  %v1078 = vpop.permute.xlu0 %1077
  %1080 = vrot.lane.b32.xlu0 %v1057, 108
  %v1081 = vpop.permute.xlu0 %1080
  %1083 = vrot.lane.b32.xlu0 %v1057, 106
  %v1084 = vpop.permute.xlu0 %1083
  %1086 = vrot.lane.b32.xlu0 %v1057, 100
  %v1087 = vpop.permute.xlu0 %1086
  %1089 = vrot.lane.b32.xlu0 %v1057, 98
  %v1090 = vpop.permute.xlu0 %1089
  %1092 = vrot.lane.b32.xlu0 %v1057, 96
  %v1093 = vpop.permute.xlu0 %1092
  %1095 = vrot.lane.b32.xlu0 %v1057, 94
  %v1096 = vpop.permute.xlu0 %1095
  %1098 = vrot.lane.b32.xlu0 %v1057, 92
  %v1099 = vpop.permute.xlu0 %1098
  %1101 = vrot.lane.b32.xlu0 %v1057, 86
  %v1102 = vpop.permute.xlu0 %1101
  %1104 = vrot.lane.b32.xlu0 %v1057, 116
  %v1105 = vpop.permute.xlu0 %1104
  %1106 = vrot.lane.b32.xlu0 %v1057, 84
  %v1107 = vpop.permute.xlu0 %1106
  %1108 = vrot.lane.b32.xlu0 %v1060, 84
  %v1109 = vpop.permute.xlu0 %1108
  %1110 = vrot.lane.b32.xlu0 %v1063, 84
  %v1111 = vpop.permute.xlu0 %1110
  %1112 = vrot.lane.b32.xlu0 %v1066, 84
  %v1113 = vpop.permute.xlu0 %1112
  %1114 = vrot.lane.b32.xlu0 %v1105, 84
  %v1115 = vpop.permute.xlu0 %1114
  %1116 = vrot.lane.b32.xlu0 %v1072, 84
  %v1117 = vpop.permute.xlu0 %1116
  %1118 = vrot.lane.b32.xlu0 %v1075, 84
  %v1119 = vpop.permute.xlu0 %1118
  %1120 = vrot.lane.b32.xlu0 %v1078, 84
  %v1121 = vpop.permute.xlu0 %1120
  %1122 = vrot.lane.b32.xlu0 %v1081, 84
  %v1123 = vpop.permute.xlu0 %1122
  %v1133 = vld [vmem:[%s5] sm:$0xff]
  %v1134 = vld [vmem:[%s5 + $0x8] sm:$0xff]
  %v1135 = vld [vmem:[%s5 + $0x10] sm:$0xff]
  %v1136 = vld [vmem:[%s5 + $0x18] sm:$0xff]
  %v1137 = vld [vmem:[%s5 + $0x20] sm:$0xff]
  %v1138 = vld [vmem:[%s5 + $0x28] sm:$0xff]
  %v1139 = vld [vmem:[%s5 + $0x30] sm:$0xff]
  %v1140 = vld [vmem:[%s5 + $0x38] sm:$0xff]
  %v1141 = vld [vmem:[%s5 + $0x40] sm:$0xff]
  %v1142 = vld [vmem:[%s5 + $0x48] sm:$0xff]
  %v1143 = vld [vmem:[%s5 + $0x50] sm:$0xff]
  %v1144 = vld [vmem:[%s5 + $0x58] sm:$0xff]
  %v1145 = vld [vmem:[%s5 + $0x60] sm:$0xff]
  %v1146 = vld [vmem:[%s5 + $0x68] sm:$0xff]
  %v1147 = vld [vmem:[%s5 + $0x70] sm:$0xff]
  %v1148 = vld [vmem:[%s5 + $0x78] sm:$0xff]
  %v1149 = vld [vmem:[%s6] sm:$0xff]
  %v1150 = vld [vmem:[%s6 + $0x8] sm:$0xff]
  %v1151 = vld [vmem:[%s6 + $0x10] sm:$0xff]
  %v1152 = vld [vmem:[%s6 + $0x18] sm:$0xff]
  %v1153 = vld [vmem:[%s6 + $0x20] sm:$0xff]
  %v1154 = vld [vmem:[%s6 + $0x28] sm:$0xff]
  %v1155 = vld [vmem:[%s6 + $0x30] sm:$0xff]
  %v1156 = vld [vmem:[%s6 + $0x38] sm:$0xff]
  %1158 = vset.pattern.permute.xlu0 0
  %1159 = vperm.xlu0 %1158, %v1149
  %v1160 = vpop.permute.xlu0 %1159
  %1163 = vset.pattern.permute.xlu0 0
  %1164 = vperm.xlu0 %1163, %v1150
  %v1165 = vpop.permute.xlu0 %1164
  %1168 = vset.pattern.permute.xlu0 0
  %1169 = vperm.xlu0 %1168, %v1151
  %v1170 = vpop.permute.xlu0 %1169
  %1173 = vset.pattern.permute.xlu0 0
  %1174 = vperm.xlu0 %1173, %v1152
  %v1175 = vpop.permute.xlu0 %1174
  %1178 = vset.pattern.permute.xlu0 0
  %1179 = vperm.xlu0 %1178, %v1153
  %v1180 = vpop.permute.xlu0 %1179
  %1183 = vset.pattern.permute.xlu0 0
  %1184 = vperm.xlu0 %1183, %v1154
  %v1185 = vpop.permute.xlu0 %1184
  %1188 = vset.pattern.permute.xlu0 0
  %1189 = vperm.xlu0 %1188, %v1155
  %v1190 = vpop.permute.xlu0 %1189
  %1193 = vset.pattern.permute.xlu0 0
  %1194 = vperm.xlu0 %1193, %v1156
  %v1195 = vpop.permute.xlu0 %1194
  %v1198 = vsel %vm745, %v1134, 0
  %v1201 = vsel %vm745, %v1136, 0
  %v1204 = vsel %vm745, %v1138, 0
  %v1207 = vsel %vm745, %v1140, 0
  %v1210 = vsel %vm745, %v1142, 0
  %v1213 = vsel %vm745, %v1144, 0
  %v1216 = vsel %vm745, %v1146, 0
  %v1219 = vsel %vm745, %v1148, 0
  %1221 = vmatprep.subr.mxu0 0.0
  %1222 = vmatpush1.msra.mxu0 %v1057
  %1223 = vmatprep.subr.mxu0 0.0
  %1224 = vmatpush1.msra.mxu0 %v1060
  %1225 = vmatprep.subr.mxu0 0.0
  %1226 = vmatpush1.msra.mxu0 %v1063
  %1227 = vmatprep.subr.mxu0 0.0
  %1228 = vmatpush1.msra.mxu0 %v1066
  %1229 = vmatprep.subr.mxu0 0.0
  %1230 = vmatpush1.msra.mxu0 %v1069
  %1231 = vmatprep.subr.mxu0 0.0
  %1232 = vmatpush1.msra.mxu0 %v1072
  %1233 = vmatprep.subr.mxu0 0.0
  %1234 = vmatpush1.msra.mxu0 %v1075
  %1235 = vmatprep.subr.mxu0 0.0
  %1236 = vmatpush1.msra.mxu0 %v1078
  %1237 = vmatprep.subr.mxu0 0.0
  %1238 = vmatpush1.msra.mxu0 %v1081
  %1239 = vmatprep.subr.mxu0 0.0
  %1240 = vmatpush1.msra.mxu0 %v1084
  %1241 = vmatprep.subr.mxu0 0.0
  %1242 = vmatpush1.msra.mxu0 %v1087
  %1243 = vmatprep.subr.mxu0 0.0
  %1244 = vmatpush1.msra.mxu0 %v1090
  %1245 = vmatprep.subr.mxu0 0.0
  %1246 = vmatpush1.msra.mxu0 %v1093
  %1247 = vmatprep.subr.mxu0 0.0
  %1248 = vmatpush1.msra.mxu0 %v1096
  %1249 = vmatprep.subr.mxu0 0.0
  %1250 = vmatpush1.msra.mxu0 %v1099
  %1251 = vmatprep.subr.mxu0 0.0
  %1252 = vmatpush1.msra.mxu0 %v1102
  %1253 = vmatprep.subr.mxu0 0.0
  %1254 = vmatpush1.msra.mxu0 %v1107
  %1255 = vmatprep.subr.mxu0 0.0
  %1256 = vmatpush1.msra.mxu0 %v1109
  %1257 = vmatprep.subr.mxu0 0.0
  %1258 = vmatpush1.msra.mxu0 %v1111
  %1259 = vmatprep.subr.mxu0 0.0
  %1260 = vmatpush1.msra.mxu0 %v1113
  %1261 = vmatprep.subr.mxu0 0.0
  %1262 = vmatpush1.msra.mxu0 %v1115
  %1263 = vmatprep.subr.mxu0 0.0
  %1264 = vmatpush1.msra.mxu0 %v1117
  %1265 = vmatprep.subr.mxu0 0.0
  %1266 = vmatpush1.msra.mxu0 %v1119
  %1267 = vmatprep.subr.mxu0 0.0
  %1268 = vmatpush1.msra.mxu0 %v1121
  %1269 = vmatprep.subr.mxu0 0.0
  %1270 = vmatpush1.msra.mxu0 %v1123
  %1271 = vmatprep.subr.mxu0 0.0
  %1272 = vmatpush1.msra.mxu0 0.0
  %1273 = vmatprep.subr.mxu0 0.0
  %1274 = vmatpush1.msra.mxu0 0.0
  %1275 = vmatprep.subr.mxu0 0.0
  %1276 = vmatpush1.msra.mxu0 0.0
  %1277 = vmatprep.subr.mxu0 0.0
  %1278 = vmatpush1.msra.mxu0 0.0
  %1279 = vmatprep.subr.mxu0 0.0
  %1280 = vmatpush1.msra.mxu0 0.0
  %1281 = vmatprep.subr.mxu0 0.0
  %1282 = vmatpush1.msra.mxu0 0.0
  %1283 = vmatprep.subr.mxu0 0.0
  %1284 = vmatpush1.msra.mxu0 0.0
  %1285 = vmatprep.mubr.f32.mxu0 %v1198
  %1286 = vmatmul.mubr.f32.gmra.mrb[0].mxu0 %v1133
  %v1287 = vpop.f32.mrb[0].mxu0
  %v1288 = vadd.f32 %v1160, %v1287
  %v1289 = vpop.f32.mrb[0].mxu0
  %1290 = vmatprep.mubr.f32.mxu0 %v1201
  %1291 = vmatmul.mubr.f32.gmra.mrb[0].mxu0 %v1135
  %v1292 = vpop.f32.mrb[0].mxu0
  %v1293 = vadd.f32 %v1165, %v1292
  %v1294 = vpop.f32.mrb[0].mxu0
  %1295 = vmatprep.mubr.f32.mxu0 %v1204
  %1296 = vmatmul.mubr.f32.gmra.mrb[0].mxu0 %v1137
  %v1297 = vpop.f32.mrb[0].mxu0
  %v1298 = vadd.f32 %v1170, %v1297
  %v1299 = vpop.f32.mrb[0].mxu0
  %1300 = vmatprep.mubr.f32.mxu0 %v1207
  %1301 = vmatmul.mubr.f32.gmra.mrb[0].mxu0 %v1139
  %v1302 = vpop.f32.mrb[0].mxu0
  %v1303 = vadd.f32 %v1175, %v1302
  %v1304 = vpop.f32.mrb[0].mxu0
  %1305 = vmatprep.mubr.f32.mxu0 %v1210
  %1306 = vmatmul.mubr.f32.gmra.mrb[0].mxu0 %v1141
  %v1307 = vpop.f32.mrb[0].mxu0
  %v1308 = vadd.f32 %v1180, %v1307
  %v1309 = vpop.f32.mrb[0].mxu0
  %1310 = vmatprep.mubr.f32.mxu0 %v1213
  %1311 = vmatmul.mubr.f32.gmra.mrb[0].mxu0 %v1143
  %v1312 = vpop.f32.mrb[0].mxu0
  %v1313 = vadd.f32 %v1185, %v1312
  %v1314 = vpop.f32.mrb[0].mxu0
  %1315 = vmatprep.mubr.f32.mxu0 %v1216
  %1316 = vmatmul.mubr.f32.gmra.mrb[0].mxu0 %v1145
  %v1317 = vpop.f32.mrb[0].mxu0
  %v1318 = vadd.f32 %v1190, %v1317
  %v1319 = vpop.f32.mrb[0].mxu0
  %1320 = vmatprep.mubr.f32.mxu0 %v1219
  %1321 = vmatmul.mubr.f32.gmra.mrb[0].mxu0 %v1147
  %v1322 = vpop.f32.mrb[0].mxu0
  %v1323 = vadd.f32 %v1195, %v1322
  %v1324 = vpop.f32.mrb[0].mxu0
  %1325 = vdwg.mxu0
  %v1326 = vmax.f32 %v1288, 0.0
  %v1327 = vmax.f32 %v1293, 0.0
  %v1328 = vmax.f32 %v1298, 0.0
  %v1329 = vmax.f32 %v1303, 0.0
  %v1330 = vmax.f32 %v1308, 0.0
  %v1331 = vmax.f32 %v1313, 0.0
  %v1332 = vmax.f32 %v1318, 0.0
  %v1333 = vmax.f32 %v1323, 0.0
  %v1334 = vld [vmem:[%s7] sm:$0xff]
  %v1335 = vld [vmem:[%s7 + $0x8] sm:$0x3]
  %v1336 = vld [vmem:[%s8] sm:$0xff]
  %v1337 = vld [vmem:[%s8 + $0x8] sm:$0x3]
  %1339 = vset.pattern.permute.xlu0 0
  %1340 = vperm.xlu0 %1339, %v1336
  %v1341 = vpop.permute.xlu0 %1340
  %1344 = vset.pattern.permute.xlu0 0
  %1345 = vperm.xlu0 %1344, %v1337
  %v1346 = vpop.permute.xlu0 %1345
  %vm1348 = vcmask 523264
  %v1350 = vsel %vm1348, %v1334, 0
  %v1353 = vsel %vm1348, %v1335, 0
  %1355 = vmatprep.subr.mxu0 0.0
  %1356 = vmatpush1.msra.mxu0 %v1326
  %1357 = vmatprep.subr.mxu0 0.0
  %1358 = vmatpush1.msra.mxu0 %v1327
  %1359 = vmatprep.subr.mxu0 0.0
  %1360 = vmatpush1.msra.mxu0 %v1328
  %1361 = vmatprep.subr.mxu0 0.0
  %1362 = vmatpush1.msra.mxu0 %v1329
  %1363 = vmatprep.subr.mxu0 0.0
  %1364 = vmatpush1.msra.mxu0 %v1330
  %1365 = vmatprep.subr.mxu0 0.0
  %1366 = vmatpush1.msra.mxu0 %v1331
  %1367 = vmatprep.subr.mxu0 0.0
  %1368 = vmatpush1.msra.mxu0 %v1332
  %1369 = vmatprep.subr.mxu0 0.0
  %1370 = vmatpush1.msra.mxu0 %v1333
  %1371 = vmatprep.subr.mxu0 0.0
  %1372 = vmatpush1.msra.mxu0 0.0
  %1373 = vmatprep.subr.mxu0 0.0
  %1374 = vmatpush1.msra.mxu0 0.0
  %1375 = vmatprep.subr.mxu0 0.0
  %1376 = vmatpush1.msra.mxu0 0.0
  %1377 = vmatprep.subr.mxu0 0.0
  %1378 = vmatpush1.msra.mxu0 0.0
  %1379 = vmatprep.subr.mxu0 0.0
  %1380 = vmatpush1.msra.mxu0 0.0
  %1381 = vmatprep.subr.mxu0 0.0
  %1382 = vmatpush1.msra.mxu0 0.0
  %1383 = vmatprep.subr.mxu0 0.0
  %1384 = vmatpush1.msra.mxu0 0.0
  %1385 = vmatprep.subr.mxu0 0.0
  %1386 = vmatpush1.msra.mxu0 0.0
  %1387 = vmatprep.subr.mxu0 0.0
  %1388 = vmatpush1.msra.mxu0 0.0
  %1389 = vmatprep.subr.mxu0 0.0
  %1390 = vmatpush1.msra.mxu0 0.0
  %1391 = vmatprep.subr.mxu0 0.0
  %1392 = vmatpush1.msra.mxu0 0.0
  %1393 = vmatprep.subr.mxu0 0.0
  %1394 = vmatpush1.msra.mxu0 0.0
  %1395 = vmatprep.subr.mxu0 0.0
  %1396 = vmatpush1.msra.mxu0 0.0
  %1397 = vmatprep.subr.mxu0 0.0
  %1398 = vmatpush1.msra.mxu0 0.0
  %1399 = vmatprep.subr.mxu0 0.0
  %1400 = vmatpush1.msra.mxu0 0.0
  %1401 = vmatprep.subr.mxu0 0.0
  %1402 = vmatpush1.msra.mxu0 0.0
  %1403 = vmatprep.subr.mxu0 0.0
  %1404 = vmatpush1.msra.mxu0 0.0
  %1405 = vmatprep.subr.mxu0 0.0
  %1406 = vmatpush1.msra.mxu0 0.0
  %1407 = vmatprep.subr.mxu0 0.0
  %1408 = vmatpush1.msra.mxu0 0.0
  %1409 = vmatprep.subr.mxu0 0.0
  %1410 = vmatpush1.msra.mxu0 0.0
  %1411 = vmatprep.subr.mxu0 0.0
  %1412 = vmatpush1.msra.mxu0 0.0
  %1413 = vmatprep.subr.mxu0 0.0
  %1414 = vmatpush1.msra.mxu0 0.0
  %1415 = vmatprep.subr.mxu0 0.0
  %1416 = vmatpush1.msra.mxu0 0.0
  %1417 = vmatprep.subr.mxu0 0.0
  %1418 = vmatpush1.msra.mxu0 0.0
  %1419 = vmatprep.mubr.f32.mxu0 0.0
  %1420 = vmatmul.mubr.f32.gmra.mrb[0].mxu0 %v1350
  %v1421 = vpop.f32.mrb[0].mxu0
  %v1422 = vadd.f32 %v1341, %v1421
  %v1423 = vpop.f32.mrb[0].mxu0
  %1424 = vmatprep.mubr.f32.mxu0 0.0
  %1425 = vmatmul.mubr.f32.gmra.mrb[0].mxu0 %v1353
  %v1426 = vpop.f32.mrb[0].mxu0
  %v1427 = vadd.f32 %v1346, %v1426
  %v1428 = vpop.f32.mrb[0].mxu0
  %1429 = vdwg.mxu0
  %vm1430 = vcmask 15360
  %v1431 = vsel %vm1430, %v1422, -inf
  %vm1432 = vcmask 9216
  %v1433 = vsel %vm1432, %v1427, -inf
  %v1434 = vmax.f32 %v1431, %v1433
  %v1435 = vrot.slane %v1434, 4
  %v1436 = vmax.f32 %v1434, %v1435
  %v1437 = vrot.slane %v1436, 2
  %v1438 = vmax.f32 %v1436, %v1437
  %v1439 = vrot.slane %v1438, 1
  %v1440 = vmax.f32 %v1438, %v1439
  %v1441 = vsub.f32 %v1422, %v1440
  %v1442 = vsub.f32 %v1427, %v1440
  %v1443 = vmul.f32 %v1441, 1.442695
  %v1444 = vpow.pop %v1443
  %v1445 = vmul.f32 %v1442, 1.442695
  %v1446 = vpow.pop %v1445
  %v1447 = vsel %vm1430, %v1444, 0.0
  %v1448 = vsel %vm1432, %v1446, 0.0
  %v1449 = vadd.f32 %v1447, %v1448
  %v1450 = vrot.slane %v1449, 4
  %v1451 = vadd.f32 %v1449, %v1450
  %v1452 = vrot.slane %v1451, 2
  %v1453 = vadd.f32 %v1451, %v1452
  %v1454 = vrot.slane %v1453, 1
  %v1455 = vadd.f32 %v1453, %v1454
  %v1456 = vlog2.pop %v1455
  %v1457 = vmul.f32 %v1456, 0.6931472
  %v1458 = vsub.f32 %v1441, %v1457
  %v1459 = vsub.f32 %v1442, %v1457
  %1460 = vst.msk [vmem:[%s9] sm:$0xff] %vm1430, %v1458
  %1461 = vst.msk [vmem:[%s9 + $0x8] sm:$0x3] %vm1432, %v1459
  // Predicated region
  $region38: #{convnet_forward.1} parent=0 // pred_check
    _
  $region39: #{convnet_forward.1} parent=0 // pred_check_branch
    %1463 = sbr.rel (0) target = $region41
  $region40: #{convnet_forward.1} parent=0 // pred_region
    _
  $region41: #{convnet_forward.1} parent=0 // pred_fallthru
    _
  // Predicated region
  $region42: #{convnet_forward.1} parent=0 // pred_check
    _
  $region43: #{convnet_forward.1} parent=0 // pred_check_branch
    %1465 = sbr.rel (0) target = $region45
  $region44: #{convnet_forward.1} parent=0 // pred_region
    _
  $region45: #{convnet_forward.1} parent=0 // pred_fallthru
    _

</llo_original>
